<compile_context>
chip_gen: v6e
topology: v6e:2x2x1
jax: 0.10.0
libtpu: 0.0.40
codegen_flags: <defaults>
</compile_context>

<pallas_src>
import functools

import jax
import jax.numpy as jnp
from jax import lax
from jax.experimental import pallas as pl
from jax.experimental.pallas import tpu as pltpu


# ----------------------------------------------------------------------------
# Fused Conv3x3 (padding=1, stride=1) kernel.
# Grid over batch; whole (Ho, Wo) tile per step.
# ----------------------------------------------------------------------------
def _conv_bn_stats_kernel(*refs, pool, ho, wo, cin, cout):
    if pool:
        x_ref, w_ref, y_ref, stats_ref, pad_ref, col_ref = refs
    else:
        x_ref, sc_ref, sh_ref, w_ref, y_ref, stats_ref, pad_ref, col_ref = refs

    # ---- input read (+ fused 2x2 maxpool OR fused BN-normalize + ReLU) ----
    if pool:
        x = x_ref[0]                                    # (ho, 2, wo, 2*cin) bf16
        m = jnp.maximum(x[..., :cin], x[..., cin:])     # max over the W pair
        p = jnp.maximum(m[:, 0], m[:, 1])               # max over the H pair -> (ho, wo, cin)
    else:
        q = x_ref[0].astype(jnp.float32)                # (ho*wo, cin) pre-BN conv out
        q = jnp.maximum(q * sc_ref[...] + sh_ref[...], 0.0)   # prev layer BN + ReLU
        p = q.astype(jnp.bfloat16).reshape(ho, wo, cin)

    # ---- 1-pixel zero halo: zero only the 4 border strips ------------------
    zrow = jnp.zeros((1, wo + 2, cin), jnp.bfloat16)
    zcol = jnp.zeros((ho + 2, 1, cin), jnp.bfloat16)
    pad_ref[0:1, :, :] = zrow
    pad_ref[ho + 1:ho + 2, :, :] = zrow
    pad_ref[:, 0:1, :] = zcol
    pad_ref[:, wo + 1:wo + 2, :] = zcol
    pad_ref[1:ho + 1, 1:wo + 1, :] = p.astype(jnp.bfloat16)

    # ---- im2col staging: (ho, wo, 9*cin) bf16 -------------------------------
    for t in range(9):
        dh, dw = divmod(t, 3)
        col_ref[:, :, t * cin:(t + 1) * cin] = pad_ref[dh:dh + ho, dw:dw + wo, :]

    # ---- single big-K MXU matmul: (ho*wo, 9*cin) @ (9*cin, cout), f32 acc ---
    col = col_ref[...].reshape(ho * wo, 9 * cin)
    acc = jnp.dot(col, w_ref[...], preferred_element_type=jnp.float32)
    # NOTE: conv bias intentionally omitted -- a per-channel constant added
    # before train-mode BatchNorm cancels exactly (the batch mean shifts too).

    y_ref[0] = acc.astype(y_ref.dtype)                  # bf16 store of pre-BN conv out

    # ---- fused BN pass 1: per-image channel sum & sum-of-squares -----------
    stats_ref[0, 0:1, :] = jnp.sum(acc, axis=0, keepdims=True)
    stats_ref[0, 1:2, :] = jnp.sum(acc * acc, axis=0, keepdims=True)


def conv3x3_bn_stats(x, w_hwio, *, pool, ho, wo, scale=None, shift=None):
    _, _, cin, cout = w_hwio.shape
    n = x.shape[0]
    w9 = w_hwio.astype(jnp.bfloat16).reshape(9 * cin, cout)   # (kh,kw,cin) rows
    kernel = functools.partial(_conv_bn_stats_kernel, pool=pool,
                               ho=ho, wo=wo, cin=cin, cout=cout)
    w_spec = pl.BlockSpec((9 * cin, cout), lambda i: (0, 0))

    if pool:
        # pure view: exposes the 2x2 pool pairs to the kernel
        x_in = x.reshape(n, ho, 2, wo, 2 * cin)
        in_specs = [pl.BlockSpec((1, ho, 2, wo, 2 * cin),
                                 lambda i: (i, 0, 0, 0, 0)),
                    w_spec]
        args = (x_in, w9)
    else:
        sc = scale.reshape(1, cin).astype(jnp.float32)
        sh = shift.reshape(1, cin).astype(jnp.float32)
        in_specs = [pl.BlockSpec((1, ho * wo, cin), lambda i: (i, 0, 0)),
                    pl.BlockSpec((1, cin), lambda i: (0, 0)),
                    pl.BlockSpec((1, cin), lambda i: (0, 0)),
                    w_spec]
        args = (x, sc, sh, w9)

    y, stats = pl.pallas_call(
        kernel,
        out_shape=(jax.ShapeDtypeStruct((n, ho * wo, cout), jnp.bfloat16),
                   jax.ShapeDtypeStruct((n, 2, cout), jnp.float32)),
        grid=(n,),
        in_specs=in_specs,
        out_specs=(pl.BlockSpec((1, ho * wo, cout), lambda i: (i, 0, 0)),
                   pl.BlockSpec((1, 2, cout), lambda i: (i, 0, 0))),
        scratch_shapes=[pltpu.VMEM((ho + 2, wo + 2, cin), jnp.bfloat16),
                        pltpu.VMEM((ho, wo, 9 * cin), jnp.bfloat16)],
        compiler_params=pltpu.CompilerParams(
            dimension_semantics=("parallel",)),
    )(*args)
    return y, stats


# ----------------------------------------------------------------------------
# Tiny per-channel glue: fold per-image stats into BN scale/shift.
# ----------------------------------------------------------------------------
def bn_affine(stats, gamma, beta, *, count, eps=1e-5):
    s = jnp.sum(stats, axis=0)                 # (2, C)
    mean = s[0] / count
    ex2 = s[1] / count
    var = jnp.maximum(ex2 - mean * mean, 0.0)
    inv = lax.rsqrt(var + eps)
    scale = gamma.reshape(-1) * inv
    shift = beta.reshape(-1) - mean * scale
    return scale, shift


# ----------------------------------------------------------------------------
# BatchNorm-normalize + ReLU for the LAST layer only (intermediate layers get
# this fused into the next conv's input read).  scale/shift are (1, C) inputs
# broadcast inside the kernel (no host-side tiling).
# ----------------------------------------------------------------------------
def _scale_shift_relu_kernel(y_ref, sc_ref, sh_ref, o_ref):
    o_ref[0] = jnp.maximum(
        y_ref[0].astype(jnp.float32) * sc_ref[...] + sh_ref[...], 0.0)


def scale_shift_relu(y, scale, shift):
    n, hw, c = y.shape
    sc = scale.reshape(1, c).astype(jnp.float32)
    sh = shift.reshape(1, c).astype(jnp.float32)
    # TODO(synk): at production sizes tile the hw axis (2-D grid) for VMEM /
    # pipelining depth on v7x.
    out = pl.pallas_call(
        _scale_shift_relu_kernel,
        out_shape=jax.ShapeDtypeStruct((n, hw, c), jnp.float32),
        grid=(n,),
        in_specs=[pl.BlockSpec((1, hw, c), lambda i: (i, 0, 0)),
                  pl.BlockSpec((1, c), lambda i: (0, 0)),
                  pl.BlockSpec((1, c), lambda i: (0, 0))],
        out_specs=pl.BlockSpec((1, hw, c), lambda i: (i, 0, 0)),
        compiler_params=pltpu.CompilerParams(
            dimension_semantics=("parallel",)),
    )(y, sc, sh)
    return out


# ----------------------------------------------------------------------------
# DownBlock forward
# ----------------------------------------------------------------------------
def down_block(x_nhwc, layers):
    n, h, w, _ = x_nhwc.shape
    ho, wo = h // 2, w // 2
    count = n * ho * wo
    # the layer-0 read is at full (pre-pool) resolution -> cast to bf16 once
    x = x_nhwc.astype(jnp.bfloat16)
    y, scale, shift = None, None, None
    for li, (wk, _b, g, bt) in enumerate(layers):      # conv bias cancels in BN
        if li == 0:
            y, stats = conv3x3_bn_stats(x, wk, pool=True, ho=ho, wo=wo)
        else:
            y, stats = conv3x3_bn_stats(y, wk, pool=False, ho=ho, wo=wo,
                                        scale=scale, shift=shift)
        scale, shift = bn_affine(stats, g, bt, count=count)
    out = scale_shift_relu(y, scale, shift)            # f32
    return out.reshape(n, ho, wo, -1)


# ----------------------------------------------------------------------------
# Pure-JAX reference (bf16 conv operands, f32 accumulation -- same numerics
# contract as the kernel).  Includes the conv bias to demonstrate that dropping
# it in the kernel is cancelled by train-mode BatchNorm.
# ----------------------------------------------------------------------------
def ref_down_block(x_nhwc, layers):
    n, h, w, c = x_nhwc.shape
    x = x_nhwc.reshape(n, h // 2, 2, w // 2, 2, c).max(axis=(2, 4))
    for (wk, b, g, bt) in layers:
        y = lax.conv_general_dilated(
            x.astype(jnp.bfloat16), wk.astype(jnp.bfloat16),
            window_strides=(1, 1), padding="SAME",
            dimension_numbers=("NHWC", "HWIO", "NHWC"),
            preferred_element_type=jnp.float32,
        ) + b.reshape(1, 1, 1, -1)
        mean = y.mean(axis=(0, 1, 2), keepdims=True)
        var = ((y - mean) ** 2).mean(axis=(0, 1, 2), keepdims=True)
        yhat = (y - mean) * lax.rsqrt(var + 1e-5) * g.reshape(1, 1, 1, -1) \
            + bt.reshape(1, 1, 1, -1)
        x = jnp.maximum(yhat, 0.0)
    return x


# ----------------------------------------------------------------------------
# Deterministic parameter init (synthetic; mimics ConvBatchNorm shapes)
# ----------------------------------------------------------------------------
def make_params(key, in_channels, out_channels, nb_conv):
    layers = []
    cin = in_channels
    for _ in range(nb_conv):
        key, k1, k2, k3, k4 = jax.random.split(key, 5)
        w = 0.1 * jax.random.normal(k1, (3, 3, cin, out_channels), jnp.float32)  # HWIO
        b = 0.1 * jax.random.normal(k2, (1, out_channels), jnp.float32)
        g = 1.0 + 0.1 * jax.random.normal(k3, (1, out_channels), jnp.float32)    # BN gamma
        bt = 0.1 * jax.random.normal(k4, (1, out_channels), jnp.float32)         # BN beta
        layers.append((w, b, g, bt))
        cin = out_channels
    return layers
    # TODO(synk): BatchNorm running_mean/running_var buffer updates (training-mode
    # side effect) are not materialized; they do not affect the forward output.


if __name__ == "__main__":
    N, Cin, H, W = 2, 4, 16, 16
    Cout, nb_Conv = 8, 2

    key = jax.random.PRNGKey(0)
    kx, kp = jax.random.split(key)
    x_nchw = jax.random.normal(kx, (N, Cin, H, W), jnp.float32)   # PyTorch-style input
    x_nhwc = jnp.transpose(x_nchw, (0, 2, 3, 1))                  # boundary transpose

    layers = make_params(kp, Cin, Cout, nb_Conv)

    out = down_block(x_nhwc, layers)
    out = jax.block_until_ready(out)

    ref = ref_down_block(x_nhwc, layers)
    assert out.shape == (N, H // 2, W // 2, Cout), out.shape
    # bf16 MXU operands + bf16 storage of the pre-BN conv output at the layer
    # interface: a ~1-ulp bf16 perturbation can amplify to ~1e-2 after BN.
    err = float(jnp.max(jnp.abs(out - ref)))
    assert jnp.allclose(out, ref, atol=2e-2, rtol=2e-2), err

    print("KERNEL_OK")
</pallas_src>

<mosaic_0001>
module attributes {stable_mosaic.version = 11 : i64} {
  func.func @_conv_bn_stats_kernel(%arg0: i32, %arg1: memref<1x8x2x8x8xbf16, #tpu.memory_space<vmem>>, %arg2: memref<36x8xbf16, #tpu.memory_space<vmem>>, %arg3: memref<1x64x8xbf16, #tpu.memory_space<vmem>>, %arg4: memref<1x2x8xf32, #tpu.memory_space<vmem>>, %arg5: memref<10x10x4xbf16, #tpu.memory_space<vmem>>, %arg6: memref<8x8x36xbf16, #tpu.memory_space<vmem>>) attributes {dimension_semantics = [#tpu.dimension_semantics<parallel>], iteration_bounds = array<i64: 2>, scalar_prefetch = 0 : i64, scratch_operands = 2 : i64, tpu.core_type = #tpu.core_type<tc>, window_params = [{transform_indices = @transform_0, window_bounds = array<i64: 1, 8, 2, 8, 8>}, {pipeline_mode = #tpu.pipeline_mode<synchronous>, transform_indices = @transform_1, window_bounds = array<i64: 36, 8>}, {transform_indices = @transform_2, window_bounds = array<i64: 1, 64, 8>}, {transform_indices = @transform_3, window_bounds = array<i64: 1, 2, 8>}]} {
    %c0 = arith.constant 0 : index
    %c0_0 = arith.constant 0 : index
    %c0_1 = arith.constant 0 : index
    %c0_2 = arith.constant 0 : index
    %c0_3 = arith.constant 0 : index
    %0 = vector.load %arg1[%c0, %c0_0, %c0_1, %c0_2, %c0_3] : memref<1x8x2x8x8xbf16, #tpu.memory_space<vmem>>, vector<1x8x2x8x8xbf16>
    %1 = vector.shape_cast %0 : vector<1x8x2x8x8xbf16> to vector<8x2x8x8xbf16>
    %2 = vector.extract_strided_slice %1 {offsets = [0, 0, 0, 0], sizes = [8, 2, 8, 4], strides = [1, 1, 1, 1]} : vector<8x2x8x8xbf16> to vector<8x2x8x4xbf16>
    %3 = vector.extract_strided_slice %1 {offsets = [0, 0, 0, 4], sizes = [8, 2, 8, 4], strides = [1, 1, 1, 1]} : vector<8x2x8x8xbf16> to vector<8x2x8x4xbf16>
    %4 = arith.maximumf %2, %3 : vector<8x2x8x4xbf16>
    %5 = vector.extract_strided_slice %4 {offsets = [0, 0, 0, 0], sizes = [8, 1, 8, 4], strides = [1, 1, 1, 1]} : vector<8x2x8x4xbf16> to vector<8x1x8x4xbf16>
    %6 = vector.shape_cast %5 : vector<8x1x8x4xbf16> to vector<8x8x4xbf16>
    %7 = vector.extract_strided_slice %4 {offsets = [0, 1, 0, 0], sizes = [8, 1, 8, 4], strides = [1, 1, 1, 1]} : vector<8x2x8x4xbf16> to vector<8x1x8x4xbf16>
    %8 = vector.shape_cast %7 : vector<8x1x8x4xbf16> to vector<8x8x4xbf16>
    %9 = arith.maximumf %6, %8 : vector<8x8x4xbf16>
    %cst = arith.constant 0.000000e+00 : bf16
    %10 = vector.broadcast %cst : bf16 to vector<1x10x4xbf16>
    %cst_4 = arith.constant 0.000000e+00 : bf16
    %11 = vector.broadcast %cst_4 : bf16 to vector<10x1x4xbf16>
    %c0_5 = arith.constant 0 : index
    %c0_6 = arith.constant 0 : index
    %c0_7 = arith.constant 0 : index
    %12 = vector.load %arg5[%c0_5, %c0_6, %c0_7] : memref<10x10x4xbf16, #tpu.memory_space<vmem>>, vector<1x10x4xbf16>
    tpu.vector_store %arg5[%c0_5, %c0_6, %c0_7], %10 {strides = array<i32>} : memref<10x10x4xbf16, #tpu.memory_space<vmem>>, vector<1x10x4xbf16>,
    %c9 = arith.constant 9 : index
    %c0_8 = arith.constant 0 : index
    %c0_9 = arith.constant 0 : index
    %13 = vector.load %arg5[%c9, %c0_8, %c0_9] : memref<10x10x4xbf16, #tpu.memory_space<vmem>>, vector<1x10x4xbf16>
    tpu.vector_store %arg5[%c9, %c0_8, %c0_9], %10 {strides = array<i32>} : memref<10x10x4xbf16, #tpu.memory_space<vmem>>, vector<1x10x4xbf16>,
    %c0_10 = arith.constant 0 : index
    %c0_11 = arith.constant 0 : index
    %c0_12 = arith.constant 0 : index
    %14 = vector.load %arg5[%c0_10, %c0_11, %c0_12] : memref<10x10x4xbf16, #tpu.memory_space<vmem>>, vector<10x1x4xbf16>
    tpu.vector_store %arg5[%c0_10, %c0_11, %c0_12], %11 {strides = array<i32>} : memref<10x10x4xbf16, #tpu.memory_space<vmem>>, vector<10x1x4xbf16>,
    %c0_13 = arith.constant 0 : index
    %c9_14 = arith.constant 9 : index
    %c0_15 = arith.constant 0 : index
    %15 = vector.load %arg5[%c0_13, %c9_14, %c0_15] : memref<10x10x4xbf16, #tpu.memory_space<vmem>>, vector<10x1x4xbf16>
    tpu.vector_store %arg5[%c0_13, %c9_14, %c0_15], %11 {strides = array<i32>} : memref<10x10x4xbf16, #tpu.memory_space<vmem>>, vector<10x1x4xbf16>,
    %c1 = arith.constant 1 : index
    %c1_16 = arith.constant 1 : index
    %c0_17 = arith.constant 0 : index
    %16 = vector.load %arg5[%c1, %c1_16, %c0_17] : memref<10x10x4xbf16, #tpu.memory_space<vmem>>, vector<8x8x4xbf16>
    tpu.vector_store %arg5[%c1, %c1_16, %c0_17], %9 {strides = array<i32>} : memref<10x10x4xbf16, #tpu.memory_space<vmem>>, vector<8x8x4xbf16>,
    %c0_18 = arith.constant 0 : index
    %c0_19 = arith.constant 0 : index
    %c0_20 = arith.constant 0 : index
    %17 = vector.load %arg5[%c0_18, %c0_19, %c0_20] : memref<10x10x4xbf16, #tpu.memory_space<vmem>>, vector<8x8x4xbf16>
    %c0_21 = arith.constant 0 : index
    %c0_22 = arith.constant 0 : index
    %c0_23 = arith.constant 0 : index
    %18 = vector.load %arg6[%c0_21, %c0_22, %c0_23] : memref<8x8x36xbf16, #tpu.memory_space<vmem>>, vector<8x8x4xbf16>
    tpu.vector_store %arg6[%c0_21, %c0_22, %c0_23], %17 {strides = array<i32>} : memref<8x8x36xbf16, #tpu.memory_space<vmem>>, vector<8x8x4xbf16>,
    %c0_24 = arith.constant 0 : index
    %c1_25 = arith.constant 1 : index
    %c0_26 = arith.constant 0 : index
    %19 = vector.load %arg5[%c0_24, %c1_25, %c0_26] : memref<10x10x4xbf16, #tpu.memory_space<vmem>>, vector<8x8x4xbf16>
    %c0_27 = arith.constant 0 : index
    %c0_28 = arith.constant 0 : index
    %c4 = arith.constant 4 : index
    %20 = vector.load %arg6[%c0_27, %c0_28, %c4] : memref<8x8x36xbf16, #tpu.memory_space<vmem>>, vector<8x8x4xbf16>
    tpu.vector_store %arg6[%c0_27, %c0_28, %c4], %19 {strides = array<i32>} : memref<8x8x36xbf16, #tpu.memory_space<vmem>>, vector<8x8x4xbf16>,
    %c0_29 = arith.constant 0 : index
    %c2 = arith.constant 2 : index
    %c0_30 = arith.constant 0 : index
    %21 = vector.load %arg5[%c0_29, %c2, %c0_30] : memref<10x10x4xbf16, #tpu.memory_space<vmem>>, vector<8x8x4xbf16>
    %c0_31 = arith.constant 0 : index
    %c0_32 = arith.constant 0 : index
    %c8 = arith.constant 8 : index
    %22 = vector.load %arg6[%c0_31, %c0_32, %c8] : memref<8x8x36xbf16, #tpu.memory_space<vmem>>, vector<8x8x4xbf16>
    tpu.vector_store %arg6[%c0_31, %c0_32, %c8], %21 {strides = array<i32>} : memref<8x8x36xbf16, #tpu.memory_space<vmem>>, vector<8x8x4xbf16>,
    %c1_33 = arith.constant 1 : index
    %c0_34 = arith.constant 0 : index
    %c0_35 = arith.constant 0 : index
    %23 = vector.load %arg5[%c1_33, %c0_34, %c0_35] : memref<10x10x4xbf16, #tpu.memory_space<vmem>>, vector<8x8x4xbf16>
    %c0_36 = arith.constant 0 : index
    %c0_37 = arith.constant 0 : index
    %c12 = arith.constant 12 : index
    %24 = vector.load %arg6[%c0_36, %c0_37, %c12] : memref<8x8x36xbf16, #tpu.memory_space<vmem>>, vector<8x8x4xbf16>
    tpu.vector_store %arg6[%c0_36, %c0_37, %c12], %23 {strides = array<i32>} : memref<8x8x36xbf16, #tpu.memory_space<vmem>>, vector<8x8x4xbf16>,
    %c1_38 = arith.constant 1 : index
    %c1_39 = arith.constant 1 : index
    %c0_40 = arith.constant 0 : index
    %25 = vector.load %arg5[%c1_38, %c1_39, %c0_40] : memref<10x10x4xbf16, #tpu.memory_space<vmem>>, vector<8x8x4xbf16>
    %c0_41 = arith.constant 0 : index
    %c0_42 = arith.constant 0 : index
    %c16 = arith.constant 16 : index
    %26 = vector.load %arg6[%c0_41, %c0_42, %c16] : memref<8x8x36xbf16, #tpu.memory_space<vmem>>, vector<8x8x4xbf16>
    tpu.vector_store %arg6[%c0_41, %c0_42, %c16], %25 {strides = array<i32>} : memref<8x8x36xbf16, #tpu.memory_space<vmem>>, vector<8x8x4xbf16>,
    %c1_43 = arith.constant 1 : index
    %c2_44 = arith.constant 2 : index
    %c0_45 = arith.constant 0 : index
    %27 = vector.load %arg5[%c1_43, %c2_44, %c0_45] : memref<10x10x4xbf16, #tpu.memory_space<vmem>>, vector<8x8x4xbf16>
    %c0_46 = arith.constant 0 : index
    %c0_47 = arith.constant 0 : index
    %c20 = arith.constant 20 : index
    %28 = vector.load %arg6[%c0_46, %c0_47, %c20] : memref<8x8x36xbf16, #tpu.memory_space<vmem>>, vector<8x8x4xbf16>
    tpu.vector_store %arg6[%c0_46, %c0_47, %c20], %27 {strides = array<i32>} : memref<8x8x36xbf16, #tpu.memory_space<vmem>>, vector<8x8x4xbf16>,
    %c2_48 = arith.constant 2 : index
    %c0_49 = arith.constant 0 : index
    %c0_50 = arith.constant 0 : index
    %29 = vector.load %arg5[%c2_48, %c0_49, %c0_50] : memref<10x10x4xbf16, #tpu.memory_space<vmem>>, vector<8x8x4xbf16>
    %c0_51 = arith.constant 0 : index
    %c0_52 = arith.constant 0 : index
    %c24 = arith.constant 24 : index
    %30 = vector.load %arg6[%c0_51, %c0_52, %c24] : memref<8x8x36xbf16, #tpu.memory_space<vmem>>, vector<8x8x4xbf16>
    tpu.vector_store %arg6[%c0_51, %c0_52, %c24], %29 {strides = array<i32>} : memref<8x8x36xbf16, #tpu.memory_space<vmem>>, vector<8x8x4xbf16>,
    %c2_53 = arith.constant 2 : index
    %c1_54 = arith.constant 1 : index
    %c0_55 = arith.constant 0 : index
    %31 = vector.load %arg5[%c2_53, %c1_54, %c0_55] : memref<10x10x4xbf16, #tpu.memory_space<vmem>>, vector<8x8x4xbf16>
    %c0_56 = arith.constant 0 : index
    %c0_57 = arith.constant 0 : index
    %c28 = arith.constant 28 : index
    %32 = vector.load %arg6[%c0_56, %c0_57, %c28] : memref<8x8x36xbf16, #tpu.memory_space<vmem>>, vector<8x8x4xbf16>
    tpu.vector_store %arg6[%c0_56, %c0_57, %c28], %31 {strides = array<i32>} : memref<8x8x36xbf16, #tpu.memory_space<vmem>>, vector<8x8x4xbf16>,
    %c2_58 = arith.constant 2 : index
    %c2_59 = arith.constant 2 : index
    %c0_60 = arith.constant 0 : index
    %33 = vector.load %arg5[%c2_58, %c2_59, %c0_60] : memref<10x10x4xbf16, #tpu.memory_space<vmem>>, vector<8x8x4xbf16>
    %c0_61 = arith.constant 0 : index
    %c0_62 = arith.constant 0 : index
    %c32 = arith.constant 32 : index
    %34 = vector.load %arg6[%c0_61, %c0_62, %c32] : memref<8x8x36xbf16, #tpu.memory_space<vmem>>, vector<8x8x4xbf16>
    tpu.vector_store %arg6[%c0_61, %c0_62, %c32], %33 {strides = array<i32>} : memref<8x8x36xbf16, #tpu.memory_space<vmem>>, vector<8x8x4xbf16>,
    %c0_63 = arith.constant 0 : index
    %c0_64 = arith.constant 0 : index
    %c0_65 = arith.constant 0 : index
    %35 = vector.load %arg6[%c0_63, %c0_64, %c0_65] : memref<8x8x36xbf16, #tpu.memory_space<vmem>>, vector<8x8x36xbf16>
    %36 = vector.shape_cast %35 : vector<8x8x36xbf16> to vector<64x36xbf16>
    %c0_66 = arith.constant 0 : index
    %c0_67 = arith.constant 0 : index
    %37 = vector.load %arg2[%c0_66, %c0_67] : memref<36x8xbf16, #tpu.memory_space<vmem>>, vector<36x8xbf16>
    %cst_68 = arith.constant dense<0.000000e+00> : vector<64x8xf32>
    %38 = tpu.matmul %36, %37, %cst_68 {dimension_numbers = #tpu.dot_dimension_numbers<[1], [0], [0], [1], [0, 0, 1, 1], [], []>} : vector<64x36xbf16>, vector<36x8xbf16>, vector<64x8xf32> -> vector<64x8xf32>
    %39 = arith.truncf %38 : vector<64x8xf32> to vector<64x8xbf16>
    %c0_69 = arith.constant 0 : index
    %c0_70 = arith.constant 0 : index
    %c0_71 = arith.constant 0 : index
    %40 = vector.load %arg3[%c0_69, %c0_70, %c0_71] : memref<1x64x8xbf16, #tpu.memory_space<vmem>>, vector<1x64x8xbf16>
    %41 = vector.shape_cast %40 : vector<1x64x8xbf16> to vector<64x8xbf16>
    %42 = vector.shape_cast %39 : vector<64x8xbf16> to vector<1x64x8xbf16>
    tpu.vector_store %arg3[%c0_69, %c0_70, %c0_71], %42 {strides = array<i32>} : memref<1x64x8xbf16, #tpu.memory_space<vmem>>, vector<1x64x8xbf16>,
    %cst_72 = arith.constant dense<0.000000e+00> : vector<8xf32>
    %43 = vector.multi_reduction <add>, %38, %cst_72 [0] : vector<64x8xf32> to vector<8xf32>
    %44 = vector.shape_cast %43 : vector<8xf32> to vector<1x8xf32>
    %c0_73 = arith.constant 0 : index
    %c0_74 = arith.constant 0 : index
    %c0_75 = arith.constant 0 : index
    %45 = vector.load %arg4[%c0_73, %c0_74, %c0_75] : memref<1x2x8xf32, #tpu.memory_space<vmem>>, vector<1x1x8xf32>
    %46 = vector.shape_cast %45 : vector<1x1x8xf32> to vector<1x8xf32>
    %47 = vector.shape_cast %44 : vector<1x8xf32> to vector<1x1x8xf32>
    tpu.vector_store %arg4[%c0_73, %c0_74, %c0_75], %47 {strides = array<i32>} : memref<1x2x8xf32, #tpu.memory_space<vmem>>, vector<1x1x8xf32>,
    %48 = arith.mulf %38, %38 : vector<64x8xf32>
    %cst_76 = arith.constant dense<0.000000e+00> : vector<8xf32>
    %49 = vector.multi_reduction <add>, %48, %cst_76 [0] : vector<64x8xf32> to vector<8xf32>
    %50 = vector.shape_cast %49 : vector<8xf32> to vector<1x8xf32>
    %c0_77 = arith.constant 0 : index
    %c1_78 = arith.constant 1 : index
    %c0_79 = arith.constant 0 : index
    %51 = vector.load %arg4[%c0_77, %c1_78, %c0_79] : memref<1x2x8xf32, #tpu.memory_space<vmem>>, vector<1x1x8xf32>
    %52 = vector.shape_cast %51 : vector<1x1x8xf32> to vector<1x8xf32>
    %53 = vector.shape_cast %50 : vector<1x8xf32> to vector<1x1x8xf32>
    tpu.vector_store %arg4[%c0_77, %c1_78, %c0_79], %53 {strides = array<i32>} : memref<1x2x8xf32, #tpu.memory_space<vmem>>, vector<1x1x8xf32>,
    return
  }
  func.func @transform_0(%arg0: i32) -> (i32, i32, i32, i32, i32) {
    %c0_i32 = arith.constant 0 : i32
    %c0_i32_0 = arith.constant 0 : i32
    %c0_i32_1 = arith.constant 0 : i32
    %c0_i32_2 = arith.constant 0 : i32
    %c0_i32_3 = arith.constant 0 : i32
    return %arg0, %c0_i32, %c0_i32_0, %c0_i32_1, %c0_i32_2 : i32, i32, i32, i32, i32
  }
  func.func @transform_1(%arg0: i32) -> (i32, i32) {
    %c0_i32 = arith.constant 0 : i32
    %c0_i32_0 = arith.constant 0 : i32
    %c0_i32_1 = arith.constant 0 : i32
    return %c0_i32, %c0_i32_0 : i32, i32
  }
  func.func @transform_2(%arg0: i32) -> (i32, i32, i32) {
    %c0_i32 = arith.constant 0 : i32
    %c0_i32_0 = arith.constant 0 : i32
    %c0_i32_1 = arith.constant 0 : i32
    return %arg0, %c0_i32, %c0_i32_0 : i32, i32, i32
  }
  func.func @transform_3(%arg0: i32) -> (i32, i32, i32) {
    %c0_i32 = arith.constant 0 : i32
    %c0_i32_0 = arith.constant 0 : i32
    %c0_i32_1 = arith.constant 0 : i32
    return %arg0, %c0_i32, %c0_i32_0 : i32, i32, i32
  }
}

</mosaic_0001>

<llo_original>
// kernel: tpu_custom_call.1
$region0: #{tpu_custom_call.1}
  #allocation0 [shape = 'u32[]', space=smem, size = 0x4, offset = 0x4, fixed_abs, tag = 'smem constant byte address 0x4 - core index']
  #allocation1 [shape = 'u32[144,128]{1,0:T(1,128)}', space=vmem, size = 0x12000, scoped, tag = 'internal scratch']
  #allocation2 [shape = 'bf16[10,10,4]{2,1,0:T(8,128)(2,1)}', space=vmem, size = 0xa000, scoped, tag = 'scratch operand']
  #allocation3 [shape = 'bf16[8,8,36]{2,1,0:T(8,128)(2,1)}', space=vmem, size = 0x4000, scoped, tag = 'scratch operand']
  %s0 = inlined_call_operand.hbm [shape: bf16[2,8,2,8,8], index: 0, kind: input, shape index: {}]
  %s1 = inlined_call_operand.vmem [shape: bf16[36,8], index: 1, kind: input, shape index: {}]
  %s2 = inlined_call_operand.vmem [shape: bf16[2,64,8], index: 2, kind: output, shape index: {0}]
  %s3 = inlined_call_operand.hbm [shape: f32[2,2,8], index: 3, kind: output, shape index: {1}]
  %4 = xla_tuple %s2, %s3
  %s5 = sld [smem:[#allocation0]]
  $region53: #{tpu_custom_call.1} parent=0
    _
  %s7 = ssub.s32 1, %s5
  %s8 = scalar_select 0, %s7, %s5
  $region1: #{tpu_custom_call.1} parent=0
    #allocation4 [shape = 'u8[65536]{0}', space=vmem, size = 0x10000, scoped, tag = 'input window, operand 0']
    #allocation5 [shape = 's32[2]{0}', space=sflag, size = 0x8, scoped, tag = 'scoped memory for tpu_custom_call.1']
    #allocation6 [shape = 's32[2]{0}', space=sflag, size = 0x8, scoped, tag = 'scoped memory for tpu_custom_call.1']
    #allocation7 [shape = 'u8[2048]{0}', space=vmem, size = 0x800, scoped, tag = 'output window, operand 1']
    %9 = vsyncpa [#allocation5], 0
    %s10 = scalar_lea.sflag [#allocation5], 1
    %11 = vsyncpa %s10, 0
    %12 = vsyncpa [#allocation6], 0
    %s13 = scalar_lea.sflag [#allocation6], 1
    %14 = vsyncpa %s13, 0
    loop: start=0, step=1, limit=4
    $region2: #{tpu_custom_call.1} parent=1 // loop_pre_header
      _
    $region3: #{tpu_custom_call.1} parent=1 // loop_header
      %s16 = sphi 0, %s20
      %p17 = scmp.ge.s32.totalorder %s16, 4
      %s26 = sphi 0, %s28
      %s29 = sphi 0, %s26
      %s30 = sphi 0, %s29
      %s46 = sphi 0, %s30
      %s50 = sphi 0, %s50
      %s52 = sphi 0, %s50
      %s53 = sphi 0, %s52
      %s67 = sphi 0, %s53
      %s73 = sphi 0, %s75
      %s76 = sphi 0, %s73
      %s77 = sphi 0, %s76
      %s93 = sphi 0, %s77
      %s99 = sphi 0, %s101
      %s102 = sphi 0, %s99
      %s103 = sphi 0, %s102
      %s119 = sphi 0, %s103
    $region4: #{tpu_custom_call.1} parent=1 // loop_header_branch
      %19 = sbr.rel (%p17) target = $region8
    $region5: #{tpu_custom_call.1} parent=1 // loop_body
      %s21 = ssub.s32 %s16, 1
      %s22 = ssub.s32 %s16, 2
      %s23 = sadd.s32 %s16, 1
      %s24 = ssub.s32 %s16, %s23
      %p25 = scmp.eq.s32.totalorder %s24, 0
      %s27 = sadd.s32 %s26, 1
      %s28 = scalar_select %p25, %s26, %s27
      %p31 = pneg %p25
      %p32 = scmp.eq.s32.totalorder %s16, 1
      %p33 = por %p31, %p32
      %p34 = scmp.ne.s32.totalorder %s26, %s29
      %p35 = scmp.eq.s32.totalorder %s16, 0
      %p36 = por %p34, %p35
      %p37 = scmp.ne.s32.totalorder %s26, %s29
      %p38 = scmp.eq.s32.totalorder %s21, 1
      %p39 = por %p37, %p38
      %p40 = scmp.ne.s32.totalorder %s29, %s30
      %p41 = scmp.eq.s32.totalorder %s21, 0
      %p42 = por %p40, %p41
      %p43 = scmp.ne.s32.totalorder %s29, %s30
      %p44 = scmp.eq.s32.totalorder %s22, 1
      %p45 = por %p43, %p44
      %p47 = scmp.ne.s32.totalorder %s30, %s46
      %p48 = scmp.eq.s32.totalorder %s22, 0
      %p49 = por %p47, %p48
      %s51 = sadd.s32 %s50, 1
      %p54 = scmp.eq.s32.totalorder %s16, 1
      %p55 = scmp.ne.s32.totalorder %s50, %s52
      %p56 = scmp.eq.s32.totalorder %s16, 0
      %p57 = por %p55, %p56
      %p58 = scmp.ne.s32.totalorder %s50, %s52
      %p59 = scmp.eq.s32.totalorder %s21, 1
      %p60 = por %p58, %p59
      %p61 = scmp.ne.s32.totalorder %s52, %s53
      %p62 = scmp.eq.s32.totalorder %s21, 0
      %p63 = por %p61, %p62
      %p64 = scmp.ne.s32.totalorder %s52, %s53
      %p65 = scmp.eq.s32.totalorder %s22, 1
      %p66 = por %p64, %p65
      %p68 = scmp.ne.s32.totalorder %s53, %s67
      %p69 = scmp.eq.s32.totalorder %s22, 0
      %p70 = por %p68, %p69
      %s71 = ssub.s32 %s16, %s23
      %p72 = scmp.eq.s32.totalorder %s71, 0
      %s74 = sadd.s32 %s73, 1
      %s75 = scalar_select %p72, %s73, %s74
      %p78 = pneg %p72
      %p79 = scmp.eq.s32.totalorder %s16, 1
      %p80 = por %p78, %p79
      %p81 = scmp.ne.s32.totalorder %s73, %s76
      %p82 = scmp.eq.s32.totalorder %s16, 0
      %p83 = por %p81, %p82
      %p84 = scmp.ne.s32.totalorder %s73, %s76
      %p85 = scmp.eq.s32.totalorder %s21, 1
      %p86 = por %p84, %p85
      %p87 = scmp.ne.s32.totalorder %s76, %s77
      %p88 = scmp.eq.s32.totalorder %s21, 0
      %p89 = por %p87, %p88
      %p90 = scmp.ne.s32.totalorder %s76, %s77
      %p91 = scmp.eq.s32.totalorder %s22, 1
      %p92 = por %p90, %p91
      %p94 = scmp.ne.s32.totalorder %s77, %s93
      %p95 = scmp.eq.s32.totalorder %s22, 0
      %p96 = por %p94, %p95
      %s97 = ssub.s32 %s16, %s23
      %p98 = scmp.eq.s32.totalorder %s97, 0
      %s100 = sadd.s32 %s99, 1
      %s101 = scalar_select %p98, %s99, %s100
      %p104 = pneg %p98
      %p105 = scmp.eq.s32.totalorder %s16, 1
      %p106 = por %p104, %p105
      %p107 = scmp.ne.s32.totalorder %s99, %s102
      %p108 = scmp.eq.s32.totalorder %s16, 0
      %p109 = por %p107, %p108
      %p110 = scmp.ne.s32.totalorder %s99, %s102
      %p111 = scmp.eq.s32.totalorder %s21, 1
      %p112 = por %p110, %p111
      %p113 = scmp.ne.s32.totalorder %s102, %s103
      %p114 = scmp.eq.s32.totalorder %s21, 0
      %p115 = por %p113, %p114
      %p116 = scmp.ne.s32.totalorder %s102, %s103
      %p117 = scmp.eq.s32.totalorder %s22, 1
      %p118 = por %p116, %p117
      %p120 = scmp.ne.s32.totalorder %s103, %s119
      %p121 = scmp.eq.s32.totalorder %s22, 0
      %p122 = por %p120, %p121
      %p123 = scmp.le.s32.totalorder 1, %s16
      %p124 = scmp.lt.s32.totalorder %s16, 3
      %p125 = pnand %p123, %p124
      %p126 = pneg %p125
      // Predicated region
      $region9: #{tpu_custom_call.1} parent=5 // pred_check
        _
      $region10: #{tpu_custom_call.1} parent=5 // pred_check_branch
        %128 = sbr.rel (%p125) target = $region12
      $region11: #{tpu_custom_call.1} parent=5 // pred_region
        %s129 = ssub.s32 %s16, 1
        // Predicated region
        $region13: #{tpu_custom_call.1} parent=11 // pred_check
          %p130 = pneg %p63
        $region14: #{tpu_custom_call.1} parent=11 // pred_check_branch
          %132 = sbr.rel (%p130) target = $region16
        $region15: #{tpu_custom_call.1} parent=11 // pred_region
          _
        $region16: #{tpu_custom_call.1} parent=11 // pred_fallthru
          _
      $region12: #{tpu_custom_call.1} parent=5 // pred_fallthru
        _
      %p133 = scmp.lt.s32.totalorder %s16, 2
      // Predicated region
      $region17: #{tpu_custom_call.1} parent=5 // pred_check
        %p134 = pneg %p133
      $region18: #{tpu_custom_call.1} parent=5 // pred_check_branch
        %136 = sbr.rel (%p134) target = $region20
      $region19: #{tpu_custom_call.1} parent=5 // pred_region
        // Predicated region
        $region21: #{tpu_custom_call.1} parent=19 // pred_check
          %p137 = pneg %p36
        $region22: #{tpu_custom_call.1} parent=19 // pred_check_branch
          %139 = sbr.rel (%p137) target = $region24
        $region23: #{tpu_custom_call.1} parent=19 // pred_region
          %s140 = sand.u32 %s26, 1
          %s141 = scalar_lea.sflag [#allocation5], %s140
          %s142 = sand.u32 %s26, 1
          %s143 = smul.addr %s142, 64
          %s144 = scalar_lea.vmem [#allocation4], %s143
          %s146 = ssub.s32 1024, 1024
          %147 = vsyncadd %s141, %s146
          %s148 = smul.addr %s16, 16
          %s149 = smul.addr %s148, 64
          %s150 = scalar_lea.hbm %s0, %s149
          %s151 = sshll.u32 %s144, 4
          %s152 = int_to_ptr.vmem [resolvable:$true] %s151
          %157 = dma.hbm_to_vmem [thread:$0]  %s150, 1024, %s152, %s141, 64, 64, 4
        $region24: #{tpu_custom_call.1} parent=19 // pred_fallthru
          _
      $region20: #{tpu_custom_call.1} parent=5 // pred_fallthru
        _
      %p158 = scmp.le.s32.totalorder 1, %s16
      %p159 = scmp.lt.s32.totalorder %s16, 3
      %p160 = pnand %p158, %p159
      %p161 = pneg %p160
      // Predicated region
      $region25: #{tpu_custom_call.1} parent=5 // pred_check
        _
      $region26: #{tpu_custom_call.1} parent=5 // pred_check_branch
        %163 = sbr.rel (%p160) target = $region28
      $region27: #{tpu_custom_call.1} parent=5 // pred_region
        %s164 = ssub.s32 %s16, 1
        %s165 = sand.u32 %s29, 1
        %s166 = scalar_lea.sflag [#allocation5], %s165
        %s167 = sand.u32 %s29, 1
        %s168 = smul.addr %s167, 64
        %s169 = scalar_lea.vmem [#allocation4], %s168
        // Predicated region
        $region29: #{tpu_custom_call.1} parent=27 // pred_check
          %p170 = pneg %p42
        $region30: #{tpu_custom_call.1} parent=27 // pred_check_branch
          %172 = sbr.rel (%p170) target = $region32
        $region31: #{tpu_custom_call.1} parent=27 // pred_region
          %173 = dma.done %s166, 1024
        $region32: #{tpu_custom_call.1} parent=27 // pred_fallthru
          _
        %s174 = sand.u32 %s29, 1
        %s175 = scalar_lea.sflag [#allocation5], %s174
        %s176 = sand.u32 %s29, 1
        %s177 = smul.addr %s176, 64
        %s178 = scalar_lea.vmem [#allocation4], %s177
        %p179 = pneg %p42
        %p180 = pneg %p39
        %p181 = pneg %p63
        %p182 = pneg %p60
        %p183 = pneg %p89
        %p184 = pneg %p86
        %p185 = scmp.lt.s32.totalorder %s21, 1
        %s186 = scalar_select %p185, %s21, 1
        %s187 = smul.addr %s186, 8
        %s188 = smul.addr %s187, 4
        %s189 = scalar_lea.vmem %s2, %s188
        %p190 = pneg %p115
        %p191 = pneg %p112
        %s192 = sand.u32 %s102, 1
        %s193 = scalar_lea.sflag [#allocation6], %s192
        %s194 = sand.u32 %s102, 1
        %s195 = smul.addr %s194, 2
        %s196 = scalar_lea.vmem [#allocation7], %s195
        %p197 = scmp.lt.s32.totalorder %s21, 1
        %s198 = scalar_select %p197, %s21, 1
        %s199 = smul.addr %s198, 8
        %s200 = smul.addr %s199, 4
        %s201 = scalar_lea.vmem %s2, %s200
        %v203 = vld [vmem:[%s169] sm:$0xf]
        %v204 = vld [vmem:[%s169 + $0x4] sm:$0xf]
        %v205 = vld [vmem:[%s169 + $0x8] sm:$0xf]
        %v206 = vld [vmem:[%s169 + $0xc] sm:$0xf]
        %v207 = vld [vmem:[%s169 + $0x10] sm:$0xf]
        %v208 = vld [vmem:[%s169 + $0x14] sm:$0xf]
        %v209 = vld [vmem:[%s169 + $0x18] sm:$0xf]
        %v210 = vld [vmem:[%s169 + $0x1c] sm:$0xf]
        %v211 = vld [vmem:[%s169 + $0x20] sm:$0xf]
        %v212 = vld [vmem:[%s169 + $0x24] sm:$0xf]
        %v213 = vld [vmem:[%s169 + $0x28] sm:$0xf]
        %v214 = vld [vmem:[%s169 + $0x2c] sm:$0xf]
        %v215 = vld [vmem:[%s169 + $0x30] sm:$0xf]
        %v216 = vld [vmem:[%s169 + $0x34] sm:$0xf]
        %v217 = vld [vmem:[%s169 + $0x38] sm:$0xf]
        %v218 = vld [vmem:[%s169 + $0x3c] sm:$0xf]
        %235 = vrot.lane.b32.xlu0 %v203, 124
        %v236 = vpop.permute.xlu0 %235
        %237 = vrot.lane.b32.xlu0 %v204, 124
        %v238 = vpop.permute.xlu0 %237
        %239 = vrot.lane.b32.xlu0 %v205, 124
        %v240 = vpop.permute.xlu0 %239
        %241 = vrot.lane.b32.xlu0 %v206, 124
        %v242 = vpop.permute.xlu0 %241
        %243 = vrot.lane.b32.xlu0 %v207, 124
        %v244 = vpop.permute.xlu0 %243
        %245 = vrot.lane.b32.xlu0 %v208, 124
        %v246 = vpop.permute.xlu0 %245
        %247 = vrot.lane.b32.xlu0 %v209, 124
        %v248 = vpop.permute.xlu0 %247
        %249 = vrot.lane.b32.xlu0 %v210, 124
        %v250 = vpop.permute.xlu0 %249
        %251 = vrot.lane.b32.xlu0 %v211, 124
        %v252 = vpop.permute.xlu0 %251
        %253 = vrot.lane.b32.xlu0 %v212, 124
        %v254 = vpop.permute.xlu0 %253
        %255 = vrot.lane.b32.xlu0 %v213, 124
        %v256 = vpop.permute.xlu0 %255
        %257 = vrot.lane.b32.xlu0 %v214, 124
        %v258 = vpop.permute.xlu0 %257
        %259 = vrot.lane.b32.xlu0 %v215, 124
        %v260 = vpop.permute.xlu0 %259
        %261 = vrot.lane.b32.xlu0 %v216, 124
        %v262 = vpop.permute.xlu0 %261
        %263 = vrot.lane.b32.xlu0 %v217, 124
        %v264 = vpop.permute.xlu0 %263
        %265 = vrot.lane.b32.xlu0 %v218, 124
        %v266 = vpop.permute.xlu0 %265
        %v283 = vmax.bf16 %v203, %v236
        %v284 = vmax.bf16 %v204, %v238
        %v285 = vmax.bf16 %v205, %v240
        %v286 = vmax.bf16 %v206, %v242
        %v287 = vmax.bf16 %v207, %v244
        %v288 = vmax.bf16 %v208, %v246
        %v289 = vmax.bf16 %v209, %v248
        %v290 = vmax.bf16 %v210, %v250
        %v291 = vmax.bf16 %v211, %v252
        %v292 = vmax.bf16 %v212, %v254
        %v293 = vmax.bf16 %v213, %v256
        %v294 = vmax.bf16 %v214, %v258
        %v295 = vmax.bf16 %v215, %v260
        %v296 = vmax.bf16 %v216, %v262
        %v297 = vmax.bf16 %v217, %v264
        %v298 = vmax.bf16 %v218, %v266
        %v299 = vmax.bf16 %v283, %v284
        %v300 = vmax.bf16 %v285, %v286
        %v301 = vmax.bf16 %v287, %v288
        %v302 = vmax.bf16 %v289, %v290
        %v303 = vmax.bf16 %v291, %v292
        %v304 = vmax.bf16 %v293, %v294
        %v305 = vmax.bf16 %v295, %v296
        %v306 = vmax.bf16 %v297, %v298
        %vm307 = vcmask 27648
        %308 = vst.msk [vmem:[#allocation2] sm:$0xf] %vm307, 0
        %vm309 = vcmask 24576
        %310 = vst.msk [vmem:[#allocation2 + $0x4] sm:$0x1] %vm309, 0
        %s311 = scalar_lea.vmem [#allocation2], 72
        %312 = vst.msk [vmem:[%s311] sm:$0xf] %vm307, 0
        %313 = vst.msk [vmem:[%s311 + $0x4] sm:$0x1] %vm309, 0
        %vm314 = vcmask 24576
        %vm315 = vsmask.f32 256
        %vm316 = vmand %vm314, %vm315
        %v317 = vld [vmem:[#allocation2] sm:$0x1]
        %v318 = vsel %vm316, 0, %v317
        %319 = vst [vmem:[#allocation2] sm:$0x1] %v318
        %v320 = vld [vmem:[#allocation2 + $0x8] sm:$0x1]
        %v321 = vsel %vm316, 0, %v320
        %322 = vst [vmem:[#allocation2 + $0x8] sm:$0x1] %v321
        %v323 = vld [vmem:[#allocation2 + $0x10] sm:$0x1]
        %v324 = vsel %vm316, 0, %v323
        %325 = vst [vmem:[#allocation2 + $0x10] sm:$0x1] %v324
        %v326 = vld [vmem:[#allocation2 + $0x18] sm:$0x1]
        %v327 = vsel %vm316, 0, %v326
        %328 = vst [vmem:[#allocation2 + $0x18] sm:$0x1] %v327
        %v329 = vld [vmem:[#allocation2 + $0x20] sm:$0x1]
        %v330 = vsel %vm316, 0, %v329
        %331 = vst [vmem:[#allocation2 + $0x20] sm:$0x1] %v330
        %v332 = vld [vmem:[#allocation2 + $0x28] sm:$0x1]
        %v333 = vsel %vm316, 0, %v332
        %334 = vst [vmem:[#allocation2 + $0x28] sm:$0x1] %v333
        %v335 = vld [vmem:[#allocation2 + $0x30] sm:$0x1]
        %v336 = vsel %vm316, 0, %v335
        %337 = vst [vmem:[#allocation2 + $0x30] sm:$0x1] %v336
        %v338 = vld [vmem:[#allocation2 + $0x38] sm:$0x1]
        %v339 = vsel %vm316, 0, %v338
        %340 = vst [vmem:[#allocation2 + $0x38] sm:$0x1] %v339
        %v341 = vld [vmem:[#allocation2 + $0x40] sm:$0x1]
        %v342 = vsel %vm316, 0, %v341
        %343 = vst [vmem:[#allocation2 + $0x40] sm:$0x1] %v342
        %v344 = vld [vmem:[#allocation2 + $0x48] sm:$0x1]
        %v345 = vsel %vm316, 0, %v344
        %346 = vst [vmem:[#allocation2 + $0x48] sm:$0x1] %v345
        %vm347 = vsmask.f32 7938
        %vm348 = vmand %vm314, %vm347
        %v349 = vld [vmem:[#allocation2 + $0x4] sm:$0x1]
        %v350 = vsel %vm348, 0, %v349
        %351 = vst [vmem:[#allocation2 + $0x4] sm:$0x1] %v350
        %v352 = vld [vmem:[#allocation2 + $0xc] sm:$0x1]
        %v353 = vsel %vm348, 0, %v352
        %354 = vst [vmem:[#allocation2 + $0xc] sm:$0x1] %v353
        %v355 = vld [vmem:[#allocation2 + $0x14] sm:$0x1]
        %v356 = vsel %vm348, 0, %v355
        %357 = vst [vmem:[#allocation2 + $0x14] sm:$0x1] %v356
        %v358 = vld [vmem:[#allocation2 + $0x1c] sm:$0x1]
        %v359 = vsel %vm348, 0, %v358
        %360 = vst [vmem:[#allocation2 + $0x1c] sm:$0x1] %v359
        %v361 = vld [vmem:[#allocation2 + $0x24] sm:$0x1]
        %v362 = vsel %vm348, 0, %v361
        %363 = vst [vmem:[#allocation2 + $0x24] sm:$0x1] %v362
        %v364 = vld [vmem:[#allocation2 + $0x2c] sm:$0x1]
        %v365 = vsel %vm348, 0, %v364
        %366 = vst [vmem:[#allocation2 + $0x2c] sm:$0x1] %v365
        %v367 = vld [vmem:[#allocation2 + $0x34] sm:$0x1]
        %v368 = vsel %vm348, 0, %v367
        %369 = vst [vmem:[#allocation2 + $0x34] sm:$0x1] %v368
        %v370 = vld [vmem:[#allocation2 + $0x3c] sm:$0x1]
        %v371 = vsel %vm348, 0, %v370
        %372 = vst [vmem:[#allocation2 + $0x3c] sm:$0x1] %v371
        %v373 = vld [vmem:[#allocation2 + $0x44] sm:$0x1]
        %v374 = vsel %vm348, 0, %v373
        %375 = vst [vmem:[#allocation2 + $0x44] sm:$0x1] %v374
        %v376 = vld [vmem:[#allocation2 + $0x4c] sm:$0x1]
        %v377 = vsel %vm348, 0, %v376
        %378 = vst [vmem:[#allocation2 + $0x4c] sm:$0x1] %v377
        %v380 = vshrl.u32 %v299, 16
        %v382 = vrot.slane %v380, 7
        %v383 = vshll.u32 %v299, 16
        %v385 = vor.u32 %v382, %v383
        %v386 = vrot.slane %v382, 4
        %v388 = vshrl.u32 %v300, 16
        %v390 = vrot.slane %v388, 7
        %v391 = vshll.u32 %v300, 16
        %v393 = vor.u32 %v390, %v391
        %v394 = vrot.slane %v390, 4
        %v396 = vshrl.u32 %v301, 16
        %v398 = vrot.slane %v396, 7
        %v399 = vshll.u32 %v301, 16
        %v401 = vor.u32 %v398, %v399
        %v402 = vrot.slane %v398, 4
        %v404 = vshrl.u32 %v302, 16
        %v406 = vrot.slane %v404, 7
        %v407 = vshll.u32 %v302, 16
        %v409 = vor.u32 %v406, %v407
        %v410 = vrot.slane %v406, 4
        %v412 = vshrl.u32 %v303, 16
        %v414 = vrot.slane %v412, 7
        %v415 = vshll.u32 %v303, 16
        %v417 = vor.u32 %v414, %v415
        %v418 = vrot.slane %v414, 4
        %v420 = vshrl.u32 %v304, 16
        %v422 = vrot.slane %v420, 7
        %v423 = vshll.u32 %v304, 16
        %v425 = vor.u32 %v422, %v423
        %v426 = vrot.slane %v422, 4
        %v428 = vshrl.u32 %v305, 16
        %v430 = vrot.slane %v428, 7
        %v431 = vshll.u32 %v305, 16
        %v433 = vor.u32 %v430, %v431
        %v434 = vrot.slane %v430, 4
        %v436 = vshrl.u32 %v306, 16
        %v438 = vrot.slane %v436, 7
        %v439 = vshll.u32 %v306, 16
        %v441 = vor.u32 %v438, %v439
        %v442 = vrot.slane %v438, 4
        %s459 = scalar_lea.vmem [#allocation2], 8
        %vm460 = vcmask 27648
        %vm461 = vmand %vm460, %vm347
        %v462 = vld [vmem:[%s459] sm:$0xf]
        %v463 = vsel %vm461, %v385, %v462
        %464 = vst [vmem:[%s459] sm:$0xf] %v463
        %v465 = vld [vmem:[%s459 + $0x4] sm:$0x1]
        %v466 = vsel %vm316, %v386, %v465
        %467 = vst [vmem:[%s459 + $0x4] sm:$0x1] %v466
        %v468 = vld [vmem:[%s459 + $0x8] sm:$0xf]
        %v469 = vsel %vm461, %v393, %v468
        %470 = vst [vmem:[%s459 + $0x8] sm:$0xf] %v469
        %v471 = vld [vmem:[%s459 + $0xc] sm:$0x1]
        %v472 = vsel %vm316, %v394, %v471
        %473 = vst [vmem:[%s459 + $0xc] sm:$0x1] %v472
        %v474 = vld [vmem:[%s459 + $0x10] sm:$0xf]
        %v475 = vsel %vm461, %v401, %v474
        %476 = vst [vmem:[%s459 + $0x10] sm:$0xf] %v475
        %v477 = vld [vmem:[%s459 + $0x14] sm:$0x1]
        %v478 = vsel %vm316, %v402, %v477
        %479 = vst [vmem:[%s459 + $0x14] sm:$0x1] %v478
        %v480 = vld [vmem:[%s459 + $0x18] sm:$0xf]
        %v481 = vsel %vm461, %v409, %v480
        %482 = vst [vmem:[%s459 + $0x18] sm:$0xf] %v481
        %v483 = vld [vmem:[%s459 + $0x1c] sm:$0x1]
        %v484 = vsel %vm316, %v410, %v483
        %485 = vst [vmem:[%s459 + $0x1c] sm:$0x1] %v484
        %v486 = vld [vmem:[%s459 + $0x20] sm:$0xf]
        %v487 = vsel %vm461, %v417, %v486
        %488 = vst [vmem:[%s459 + $0x20] sm:$0xf] %v487
        %v489 = vld [vmem:[%s459 + $0x24] sm:$0x1]
        %v490 = vsel %vm316, %v418, %v489
        %491 = vst [vmem:[%s459 + $0x24] sm:$0x1] %v490
        %v492 = vld [vmem:[%s459 + $0x28] sm:$0xf]
        %v493 = vsel %vm461, %v425, %v492
        %494 = vst [vmem:[%s459 + $0x28] sm:$0xf] %v493
        %v495 = vld [vmem:[%s459 + $0x2c] sm:$0x1]
        %v496 = vsel %vm316, %v426, %v495
        %497 = vst [vmem:[%s459 + $0x2c] sm:$0x1] %v496
        %v498 = vld [vmem:[%s459 + $0x30] sm:$0xf]
        %v499 = vsel %vm461, %v433, %v498
        %500 = vst [vmem:[%s459 + $0x30] sm:$0xf] %v499
        %v501 = vld [vmem:[%s459 + $0x34] sm:$0x1]
        %v502 = vsel %vm316, %v434, %v501
        %503 = vst [vmem:[%s459 + $0x34] sm:$0x1] %v502
        %v504 = vld [vmem:[%s459 + $0x38] sm:$0xf]
        %v505 = vsel %vm461, %v441, %v504
        %506 = vst [vmem:[%s459 + $0x38] sm:$0xf] %v505
        %v507 = vld [vmem:[%s459 + $0x3c] sm:$0x1]
        %v508 = vsel %vm316, %v442, %v507
        %509 = vst [vmem:[%s459 + $0x3c] sm:$0x1] %v508
        %v510 = vld [vmem:[#allocation2] sm:$0xf]
        %v511 = vld [vmem:[#allocation2 + $0x8] sm:$0xf]
        %v512 = vld [vmem:[#allocation2 + $0x10] sm:$0xf]
        %v513 = vld [vmem:[#allocation2 + $0x18] sm:$0xf]
        %v514 = vld [vmem:[#allocation2 + $0x20] sm:$0xf]
        %v515 = vld [vmem:[#allocation2 + $0x28] sm:$0xf]
        %v516 = vld [vmem:[#allocation2 + $0x30] sm:$0xf]
        %v517 = vld [vmem:[#allocation2 + $0x38] sm:$0xf]
        %518 = vst.msk [vmem:[#allocation3] sm:$0xf] %vm307, %v510
        %519 = vst.msk [vmem:[#allocation3 + $0x4] sm:$0xf] %vm307, %v511
        %520 = vst.msk [vmem:[#allocation3 + $0x8] sm:$0xf] %vm307, %v512
        %521 = vst.msk [vmem:[#allocation3 + $0xc] sm:$0xf] %vm307, %v513
        %522 = vst.msk [vmem:[#allocation3 + $0x10] sm:$0xf] %vm307, %v514
        %523 = vst.msk [vmem:[#allocation3 + $0x14] sm:$0xf] %vm307, %v515
        %524 = vst.msk [vmem:[#allocation3 + $0x18] sm:$0xf] %vm307, %v516
        %525 = vst.msk [vmem:[#allocation3 + $0x1c] sm:$0xf] %vm307, %v517
        %v526 = vld [vmem:[#allocation2] sm:$0xf]
        %v527 = vld [vmem:[#allocation2 + $0x4] sm:$0x1]
        %v528 = vld [vmem:[#allocation2 + $0x8] sm:$0xf]
        %v529 = vld [vmem:[#allocation2 + $0xc] sm:$0x1]
        %v530 = vld [vmem:[#allocation2 + $0x10] sm:$0xf]
        %v531 = vld [vmem:[#allocation2 + $0x14] sm:$0x1]
        %v532 = vld [vmem:[#allocation2 + $0x18] sm:$0xf]
        %v533 = vld [vmem:[#allocation2 + $0x1c] sm:$0x1]
        %v534 = vld [vmem:[#allocation2 + $0x20] sm:$0xf]
        %v535 = vld [vmem:[#allocation2 + $0x24] sm:$0x1]
        %v536 = vld [vmem:[#allocation2 + $0x28] sm:$0xf]
        %v537 = vld [vmem:[#allocation2 + $0x2c] sm:$0x1]
        %v538 = vld [vmem:[#allocation2 + $0x30] sm:$0xf]
        %v539 = vld [vmem:[#allocation2 + $0x34] sm:$0x1]
        %v540 = vld [vmem:[#allocation2 + $0x38] sm:$0xf]
        %v541 = vld [vmem:[#allocation2 + $0x3c] sm:$0x1]
        %vm542 = vsmask.f32 3328
        %vm543 = vsmask.f32 7440
        %vm544 = vmor %vm542, %vm543
        %v546 = vshrl.u32 %v526, 16
        %v548 = vrot.slane %v546, 4
        %v549 = vshll.u32 %v526, 16
        %v551 = vrot.slane %v549, 5
        %v552 = vor.u32 %v548, %v551
        %v553 = vrot.slane %v552, 4
        %v555 = vshll.u32 %v527, 16
        %v557 = vrot.slane %v555, 5
        %v558 = vsel %vm544, %v553, %v557
        %v560 = vshrl.u32 %v528, 16
        %v562 = vrot.slane %v560, 4
        %v563 = vshll.u32 %v528, 16
        %v565 = vrot.slane %v563, 5
        %v566 = vor.u32 %v562, %v565
        %v567 = vrot.slane %v566, 4
        %v569 = vshll.u32 %v529, 16
        %v571 = vrot.slane %v569, 5
        %v572 = vsel %vm544, %v567, %v571
        %v574 = vshrl.u32 %v530, 16
        %v576 = vrot.slane %v574, 4
        %v577 = vshll.u32 %v530, 16
        %v579 = vrot.slane %v577, 5
        %v580 = vor.u32 %v576, %v579
        %v581 = vrot.slane %v580, 4
        %v583 = vshll.u32 %v531, 16
        %v585 = vrot.slane %v583, 5
        %v586 = vsel %vm544, %v581, %v585
        %v588 = vshrl.u32 %v532, 16
        %v590 = vrot.slane %v588, 4
        %v591 = vshll.u32 %v532, 16
        %v593 = vrot.slane %v591, 5
        %v594 = vor.u32 %v590, %v593
        %v595 = vrot.slane %v594, 4
        %v597 = vshll.u32 %v533, 16
        %v599 = vrot.slane %v597, 5
        %v600 = vsel %vm544, %v595, %v599
        %v602 = vshrl.u32 %v534, 16
        %v604 = vrot.slane %v602, 4
        %v605 = vshll.u32 %v534, 16
        %v607 = vrot.slane %v605, 5
        %v608 = vor.u32 %v604, %v607
        %v609 = vrot.slane %v608, 4
        %v611 = vshll.u32 %v535, 16
        %v613 = vrot.slane %v611, 5
        %v614 = vsel %vm544, %v609, %v613
        %v616 = vshrl.u32 %v536, 16
        %v618 = vrot.slane %v616, 4
        %v619 = vshll.u32 %v536, 16
        %v621 = vrot.slane %v619, 5
        %v622 = vor.u32 %v618, %v621
        %v623 = vrot.slane %v622, 4
        %v625 = vshll.u32 %v537, 16
        %v627 = vrot.slane %v625, 5
        %v628 = vsel %vm544, %v623, %v627
        %v630 = vshrl.u32 %v538, 16
        %v632 = vrot.slane %v630, 4
        %v633 = vshll.u32 %v538, 16
        %v635 = vrot.slane %v633, 5
        %v636 = vor.u32 %v632, %v635
        %v637 = vrot.slane %v636, 4
        %v639 = vshll.u32 %v539, 16
        %v641 = vrot.slane %v639, 5
        %v642 = vsel %vm544, %v637, %v641
        %v644 = vshrl.u32 %v540, 16
        %v646 = vrot.slane %v644, 4
        %v647 = vshll.u32 %v540, 16
        %v649 = vrot.slane %v647, 5
        %v650 = vor.u32 %v646, %v649
        %v651 = vrot.slane %v650, 4
        %v653 = vshll.u32 %v541, 16
        %v655 = vrot.slane %v653, 5
        %v656 = vsel %vm544, %v651, %v655
        %657 = vrot.lane.b32.xlu0 %v558, 4
        %v658 = vpop.permute.xlu0 %657
        %659 = vrot.lane.b32.xlu0 %v572, 4
        %v660 = vpop.permute.xlu0 %659
        %661 = vrot.lane.b32.xlu0 %v586, 4
        %v662 = vpop.permute.xlu0 %661
        %663 = vrot.lane.b32.xlu0 %v600, 4
        %v664 = vpop.permute.xlu0 %663
        %665 = vrot.lane.b32.xlu0 %v614, 4
        %v666 = vpop.permute.xlu0 %665
        %667 = vrot.lane.b32.xlu0 %v628, 4
        %v668 = vpop.permute.xlu0 %667
        %669 = vrot.lane.b32.xlu0 %v642, 4
        %v670 = vpop.permute.xlu0 %669
        %671 = vrot.lane.b32.xlu0 %v656, 4
        %v672 = vpop.permute.xlu0 %671
        %vm681 = vcmask 60448
        %682 = vst.msk [vmem:[#allocation3] sm:$0xf] %vm681, %v658
        %683 = vst.msk [vmem:[#allocation3 + $0x4] sm:$0xf] %vm681, %v660
        %684 = vst.msk [vmem:[#allocation3 + $0x8] sm:$0xf] %vm681, %v662
        %685 = vst.msk [vmem:[#allocation3 + $0xc] sm:$0xf] %vm681, %v664
        %686 = vst.msk [vmem:[#allocation3 + $0x10] sm:$0xf] %vm681, %v666
        %687 = vst.msk [vmem:[#allocation3 + $0x14] sm:$0xf] %vm681, %v668
        %688 = vst.msk [vmem:[#allocation3 + $0x18] sm:$0xf] %vm681, %v670
        %689 = vst.msk [vmem:[#allocation3 + $0x1c] sm:$0xf] %vm681, %v672
        %v690 = vld [vmem:[#allocation2] sm:$0xe]
        %v691 = vld [vmem:[#allocation2 + $0x4] sm:$0x1]
        %v692 = vld [vmem:[#allocation2 + $0x8] sm:$0xe]
        %v693 = vld [vmem:[#allocation2 + $0xc] sm:$0x1]
        %v694 = vld [vmem:[#allocation2 + $0x10] sm:$0xe]
        %v695 = vld [vmem:[#allocation2 + $0x14] sm:$0x1]
        %v696 = vld [vmem:[#allocation2 + $0x18] sm:$0xe]
        %v697 = vld [vmem:[#allocation2 + $0x1c] sm:$0x1]
        %v698 = vld [vmem:[#allocation2 + $0x20] sm:$0xe]
        %v699 = vld [vmem:[#allocation2 + $0x24] sm:$0x1]
        %v700 = vld [vmem:[#allocation2 + $0x28] sm:$0xe]
        %v701 = vld [vmem:[#allocation2 + $0x2c] sm:$0x1]
        %v702 = vld [vmem:[#allocation2 + $0x30] sm:$0xe]
        %v703 = vld [vmem:[#allocation2 + $0x34] sm:$0x1]
        %v704 = vld [vmem:[#allocation2 + $0x38] sm:$0xe]
        %v705 = vld [vmem:[#allocation2 + $0x3c] sm:$0x1]
        %vm722 = vcmask 1042432
        %vm723 = vcmask 1046532
        %vm724 = vmor %vm722, %vm723
        %v725 = vrot.slane %v690, 5
        %v726 = vrot.slane %v725, 4
        %v727 = vrot.slane %v691, 5
        %v728 = vsel %vm724, %v726, %v727
        %v729 = vrot.slane %v692, 5
        %v730 = vrot.slane %v729, 4
        %v731 = vrot.slane %v693, 5
        %v732 = vsel %vm724, %v730, %v731
        %v733 = vrot.slane %v694, 5
        %v734 = vrot.slane %v733, 4
        %v735 = vrot.slane %v695, 5
        %v736 = vsel %vm724, %v734, %v735
        %v737 = vrot.slane %v696, 5
        %v738 = vrot.slane %v737, 4
        %v739 = vrot.slane %v697, 5
        %v740 = vsel %vm724, %v738, %v739
        %v741 = vrot.slane %v698, 5
        %v742 = vrot.slane %v741, 4
        %v743 = vrot.slane %v699, 5
        %v744 = vsel %vm724, %v742, %v743
        %v745 = vrot.slane %v700, 5
        %v746 = vrot.slane %v745, 4
        %v747 = vrot.slane %v701, 5
        %v748 = vsel %vm724, %v746, %v747
        %v749 = vrot.slane %v702, 5
        %v750 = vrot.slane %v749, 4
        %v751 = vrot.slane %v703, 5
        %v752 = vsel %vm724, %v750, %v751
        %v753 = vrot.slane %v704, 5
        %v754 = vrot.slane %v753, 4
        %v755 = vrot.slane %v705, 5
        %v756 = vsel %vm724, %v754, %v755
        %757 = vrot.lane.b32.xlu0 %v728, 8
        %v758 = vpop.permute.xlu0 %757
        %759 = vrot.lane.b32.xlu0 %v732, 8
        %v760 = vpop.permute.xlu0 %759
        %761 = vrot.lane.b32.xlu0 %v736, 8
        %v762 = vpop.permute.xlu0 %761
        %763 = vrot.lane.b32.xlu0 %v740, 8
        %v764 = vpop.permute.xlu0 %763
        %765 = vrot.lane.b32.xlu0 %v744, 8
        %v766 = vpop.permute.xlu0 %765
        %767 = vrot.lane.b32.xlu0 %v748, 8
        %v768 = vpop.permute.xlu0 %767
        %769 = vrot.lane.b32.xlu0 %v752, 8
        %v770 = vpop.permute.xlu0 %769
        %771 = vrot.lane.b32.xlu0 %v756, 8
        %v772 = vpop.permute.xlu0 %771
        %vm781 = vcmask 93248
        %782 = vst.msk [vmem:[#allocation3] sm:$0xf] %vm781, %v758
        %783 = vst.msk [vmem:[#allocation3 + $0x4] sm:$0xf] %vm781, %v760
        %784 = vst.msk [vmem:[#allocation3 + $0x8] sm:$0xf] %vm781, %v762
        %785 = vst.msk [vmem:[#allocation3 + $0xc] sm:$0xf] %vm781, %v764
        %786 = vst.msk [vmem:[#allocation3 + $0x10] sm:$0xf] %vm781, %v766
        %787 = vst.msk [vmem:[#allocation3 + $0x14] sm:$0xf] %vm781, %v768
        %788 = vst.msk [vmem:[#allocation3 + $0x18] sm:$0xf] %vm781, %v770
        %789 = vst.msk [vmem:[#allocation3 + $0x1c] sm:$0xf] %vm781, %v772
        %v790 = vld [vmem:[%s459] sm:$0xf]
        %v791 = vld [vmem:[%s459 + $0x8] sm:$0xf]
        %v792 = vld [vmem:[%s459 + $0x10] sm:$0xf]
        %v793 = vld [vmem:[%s459 + $0x18] sm:$0xf]
        %v794 = vld [vmem:[%s459 + $0x20] sm:$0xf]
        %v795 = vld [vmem:[%s459 + $0x28] sm:$0xf]
        %v796 = vld [vmem:[%s459 + $0x30] sm:$0xf]
        %v797 = vld [vmem:[%s459 + $0x38] sm:$0xf]
        %806 = vrot.lane.b32.xlu0 %v790, 12
        %v807 = vpop.permute.xlu0 %806
        %808 = vrot.lane.b32.xlu0 %v791, 12
        %v809 = vpop.permute.xlu0 %808
        %810 = vrot.lane.b32.xlu0 %v792, 12
        %v811 = vpop.permute.xlu0 %810
        %812 = vrot.lane.b32.xlu0 %v793, 12
        %v813 = vpop.permute.xlu0 %812
        %814 = vrot.lane.b32.xlu0 %v794, 12
        %v815 = vpop.permute.xlu0 %814
        %816 = vrot.lane.b32.xlu0 %v795, 12
        %v817 = vpop.permute.xlu0 %816
        %818 = vrot.lane.b32.xlu0 %v796, 12
        %v819 = vpop.permute.xlu0 %818
        %820 = vrot.lane.b32.xlu0 %v797, 12
        %v821 = vpop.permute.xlu0 %820
        %vm830 = vcmask 126048
        %831 = vst.msk [vmem:[#allocation3] sm:$0xf] %vm830, %v807
        %832 = vst.msk [vmem:[#allocation3 + $0x4] sm:$0xf] %vm830, %v809
        %833 = vst.msk [vmem:[#allocation3 + $0x8] sm:$0xf] %vm830, %v811
        %834 = vst.msk [vmem:[#allocation3 + $0xc] sm:$0xf] %vm830, %v813
        %835 = vst.msk [vmem:[#allocation3 + $0x10] sm:$0xf] %vm830, %v815
        %836 = vst.msk [vmem:[#allocation3 + $0x14] sm:$0xf] %vm830, %v817
        %837 = vst.msk [vmem:[#allocation3 + $0x18] sm:$0xf] %vm830, %v819
        %838 = vst.msk [vmem:[#allocation3 + $0x1c] sm:$0xf] %vm830, %v821
        %v839 = vld [vmem:[%s459] sm:$0xf]
        %v840 = vld [vmem:[%s459 + $0x4] sm:$0x1]
        %v841 = vld [vmem:[%s459 + $0x8] sm:$0xf]
        %v842 = vld [vmem:[%s459 + $0xc] sm:$0x1]
        %v843 = vld [vmem:[%s459 + $0x10] sm:$0xf]
        %v844 = vld [vmem:[%s459 + $0x14] sm:$0x1]
        %v845 = vld [vmem:[%s459 + $0x18] sm:$0xf]
        %v846 = vld [vmem:[%s459 + $0x1c] sm:$0x1]
        %v847 = vld [vmem:[%s459 + $0x20] sm:$0xf]
        %v848 = vld [vmem:[%s459 + $0x24] sm:$0x1]
        %v849 = vld [vmem:[%s459 + $0x28] sm:$0xf]
        %v850 = vld [vmem:[%s459 + $0x2c] sm:$0x1]
        %v851 = vld [vmem:[%s459 + $0x30] sm:$0xf]
        %v852 = vld [vmem:[%s459 + $0x34] sm:$0x1]
        %v853 = vld [vmem:[%s459 + $0x38] sm:$0xf]
        %v854 = vld [vmem:[%s459 + $0x3c] sm:$0x1]
        %v856 = vshrl.u32 %v839, 16
        %v858 = vrot.slane %v856, 4
        %v859 = vshll.u32 %v839, 16
        %v861 = vrot.slane %v859, 5
        %v862 = vor.u32 %v858, %v861
        %v863 = vrot.slane %v862, 4
        %v865 = vshll.u32 %v840, 16
        %v867 = vrot.slane %v865, 5
        %v868 = vsel %vm544, %v863, %v867
        %v870 = vshrl.u32 %v841, 16
        %v872 = vrot.slane %v870, 4
        %v873 = vshll.u32 %v841, 16
        %v875 = vrot.slane %v873, 5
        %v876 = vor.u32 %v872, %v875
        %v877 = vrot.slane %v876, 4
        %v879 = vshll.u32 %v842, 16
        %v881 = vrot.slane %v879, 5
        %v882 = vsel %vm544, %v877, %v881
        %v884 = vshrl.u32 %v843, 16
        %v886 = vrot.slane %v884, 4
        %v887 = vshll.u32 %v843, 16
        %v889 = vrot.slane %v887, 5
        %v890 = vor.u32 %v886, %v889
        %v891 = vrot.slane %v890, 4
        %v893 = vshll.u32 %v844, 16
        %v895 = vrot.slane %v893, 5
        %v896 = vsel %vm544, %v891, %v895
        %v898 = vshrl.u32 %v845, 16
        %v900 = vrot.slane %v898, 4
        %v901 = vshll.u32 %v845, 16
        %v903 = vrot.slane %v901, 5
        %v904 = vor.u32 %v900, %v903
        %v905 = vrot.slane %v904, 4
        %v907 = vshll.u32 %v846, 16
        %v909 = vrot.slane %v907, 5
        %v910 = vsel %vm544, %v905, %v909
        %v912 = vshrl.u32 %v847, 16
        %v914 = vrot.slane %v912, 4
        %v915 = vshll.u32 %v847, 16
        %v917 = vrot.slane %v915, 5
        %v918 = vor.u32 %v914, %v917
        %v919 = vrot.slane %v918, 4
        %v921 = vshll.u32 %v848, 16
        %v923 = vrot.slane %v921, 5
        %v924 = vsel %vm544, %v919, %v923
        %v926 = vshrl.u32 %v849, 16
        %v928 = vrot.slane %v926, 4
        %v929 = vshll.u32 %v849, 16
        %v931 = vrot.slane %v929, 5
        %v932 = vor.u32 %v928, %v931
        %v933 = vrot.slane %v932, 4
        %v935 = vshll.u32 %v850, 16
        %v937 = vrot.slane %v935, 5
        %v938 = vsel %vm544, %v933, %v937
        %v940 = vshrl.u32 %v851, 16
        %v942 = vrot.slane %v940, 4
        %v943 = vshll.u32 %v851, 16
        %v945 = vrot.slane %v943, 5
        %v946 = vor.u32 %v942, %v945
        %v947 = vrot.slane %v946, 4
        %v949 = vshll.u32 %v852, 16
        %v951 = vrot.slane %v949, 5
        %v952 = vsel %vm544, %v947, %v951
        %v954 = vshrl.u32 %v853, 16
        %v956 = vrot.slane %v954, 4
        %v957 = vshll.u32 %v853, 16
        %v959 = vrot.slane %v957, 5
        %v960 = vor.u32 %v956, %v959
        %v961 = vrot.slane %v960, 4
        %v963 = vshll.u32 %v854, 16
        %v965 = vrot.slane %v963, 5
        %v966 = vsel %vm544, %v961, %v965
        %967 = vrot.lane.b32.xlu0 %v868, 16
        %v968 = vpop.permute.xlu0 %967
        %969 = vrot.lane.b32.xlu0 %v882, 16
        %v970 = vpop.permute.xlu0 %969
        %971 = vrot.lane.b32.xlu0 %v896, 16
        %v972 = vpop.permute.xlu0 %971
        %973 = vrot.lane.b32.xlu0 %v910, 16
        %v974 = vpop.permute.xlu0 %973
        %975 = vrot.lane.b32.xlu0 %v924, 16
        %v976 = vpop.permute.xlu0 %975
        %977 = vrot.lane.b32.xlu0 %v938, 16
        %v978 = vpop.permute.xlu0 %977
        %979 = vrot.lane.b32.xlu0 %v952, 16
        %v980 = vpop.permute.xlu0 %979
        %981 = vrot.lane.b32.xlu0 %v966, 16
        %v982 = vpop.permute.xlu0 %981
        %vm991 = vcmask 158848
        %992 = vst.msk [vmem:[#allocation3] sm:$0xf] %vm991, %v968
        %993 = vst.msk [vmem:[#allocation3 + $0x4] sm:$0xf] %vm991, %v970
        %994 = vst.msk [vmem:[#allocation3 + $0x8] sm:$0xf] %vm991, %v972
        %995 = vst.msk [vmem:[#allocation3 + $0xc] sm:$0xf] %vm991, %v974
        %996 = vst.msk [vmem:[#allocation3 + $0x10] sm:$0xf] %vm991, %v976
        %997 = vst.msk [vmem:[#allocation3 + $0x14] sm:$0xf] %vm991, %v978
        %998 = vst.msk [vmem:[#allocation3 + $0x18] sm:$0xf] %vm991, %v980
        %999 = vst.msk [vmem:[#allocation3 + $0x1c] sm:$0xf] %vm991, %v982
        %v1000 = vld [vmem:[%s459] sm:$0xe]
        %v1001 = vld [vmem:[%s459 + $0x4] sm:$0x1]
        %v1002 = vld [vmem:[%s459 + $0x8] sm:$0xe]
        %v1003 = vld [vmem:[%s459 + $0xc] sm:$0x1]
        %v1004 = vld [vmem:[%s459 + $0x10] sm:$0xe]
        %v1005 = vld [vmem:[%s459 + $0x14] sm:$0x1]
        %v1006 = vld [vmem:[%s459 + $0x18] sm:$0xe]
        %v1007 = vld [vmem:[%s459 + $0x1c] sm:$0x1]
        %v1008 = vld [vmem:[%s459 + $0x20] sm:$0xe]
        %v1009 = vld [vmem:[%s459 + $0x24] sm:$0x1]
        %v1010 = vld [vmem:[%s459 + $0x28] sm:$0xe]
        %v1011 = vld [vmem:[%s459 + $0x2c] sm:$0x1]
        %v1012 = vld [vmem:[%s459 + $0x30] sm:$0xe]
        %v1013 = vld [vmem:[%s459 + $0x34] sm:$0x1]
        %v1014 = vld [vmem:[%s459 + $0x38] sm:$0xe]
        %v1015 = vld [vmem:[%s459 + $0x3c] sm:$0x1]
        %v1032 = vrot.slane %v1000, 5
        %v1033 = vrot.slane %v1032, 4
        %v1034 = vrot.slane %v1001, 5
        %v1035 = vsel %vm724, %v1033, %v1034
        %v1036 = vrot.slane %v1002, 5
        %v1037 = vrot.slane %v1036, 4
        %v1038 = vrot.slane %v1003, 5
        %v1039 = vsel %vm724, %v1037, %v1038
        %v1040 = vrot.slane %v1004, 5
        %v1041 = vrot.slane %v1040, 4
        %v1042 = vrot.slane %v1005, 5
        %v1043 = vsel %vm724, %v1041, %v1042
        %v1044 = vrot.slane %v1006, 5
        %v1045 = vrot.slane %v1044, 4
        %v1046 = vrot.slane %v1007, 5
        %v1047 = vsel %vm724, %v1045, %v1046
        %v1048 = vrot.slane %v1008, 5
        %v1049 = vrot.slane %v1048, 4
        %v1050 = vrot.slane %v1009, 5
        %v1051 = vsel %vm724, %v1049, %v1050
        %v1052 = vrot.slane %v1010, 5
        %v1053 = vrot.slane %v1052, 4
        %v1054 = vrot.slane %v1011, 5
        %v1055 = vsel %vm724, %v1053, %v1054
        %v1056 = vrot.slane %v1012, 5
        %v1057 = vrot.slane %v1056, 4
        %v1058 = vrot.slane %v1013, 5
        %v1059 = vsel %vm724, %v1057, %v1058
        %v1060 = vrot.slane %v1014, 5
        %v1061 = vrot.slane %v1060, 4
        %v1062 = vrot.slane %v1015, 5
        %v1063 = vsel %vm724, %v1061, %v1062
        %1064 = vrot.lane.b32.xlu0 %v1035, 20
        %v1065 = vpop.permute.xlu0 %1064
        %1066 = vrot.lane.b32.xlu0 %v1039, 20
        %v1067 = vpop.permute.xlu0 %1066
        %1068 = vrot.lane.b32.xlu0 %v1043, 20
        %v1069 = vpop.permute.xlu0 %1068
        %1070 = vrot.lane.b32.xlu0 %v1047, 20
        %v1071 = vpop.permute.xlu0 %1070
        %1072 = vrot.lane.b32.xlu0 %v1051, 20
        %v1073 = vpop.permute.xlu0 %1072
        %1074 = vrot.lane.b32.xlu0 %v1055, 20
        %v1075 = vpop.permute.xlu0 %1074
        %1076 = vrot.lane.b32.xlu0 %v1059, 20
        %v1077 = vpop.permute.xlu0 %1076
        %1078 = vrot.lane.b32.xlu0 %v1063, 20
        %v1079 = vpop.permute.xlu0 %1078
        %vm1088 = vcmask 191648
        %1089 = vst.msk [vmem:[#allocation3] sm:$0xf] %vm1088, %v1065
        %1090 = vst.msk [vmem:[#allocation3 + $0x4] sm:$0xf] %vm1088, %v1067
        %1091 = vst.msk [vmem:[#allocation3 + $0x8] sm:$0xf] %vm1088, %v1069
        %1092 = vst.msk [vmem:[#allocation3 + $0xc] sm:$0xf] %vm1088, %v1071
        %1093 = vst.msk [vmem:[#allocation3 + $0x10] sm:$0xf] %vm1088, %v1073
        %1094 = vst.msk [vmem:[#allocation3 + $0x14] sm:$0xf] %vm1088, %v1075
        %1095 = vst.msk [vmem:[#allocation3 + $0x18] sm:$0xf] %vm1088, %v1077
        %1096 = vst.msk [vmem:[#allocation3 + $0x1c] sm:$0xf] %vm1088, %v1079
        %s1097 = scalar_lea.vmem [#allocation2], 16
        %v1098 = vld [vmem:[%s1097] sm:$0xf]
        %v1099 = vld [vmem:[%s1097 + $0x8] sm:$0xf]
        %v1100 = vld [vmem:[%s1097 + $0x10] sm:$0xf]
        %v1101 = vld [vmem:[%s1097 + $0x18] sm:$0xf]
        %v1102 = vld [vmem:[%s1097 + $0x20] sm:$0xf]
        %v1103 = vld [vmem:[%s1097 + $0x28] sm:$0xf]
        %v1104 = vld [vmem:[%s1097 + $0x30] sm:$0xf]
        %v1105 = vld [vmem:[%s1097 + $0x38] sm:$0xf]
        %1114 = vrot.lane.b32.xlu0 %v1098, 24
        %v1115 = vpop.permute.xlu0 %1114
        %1116 = vrot.lane.b32.xlu0 %v1099, 24
        %v1117 = vpop.permute.xlu0 %1116
        %1118 = vrot.lane.b32.xlu0 %v1100, 24
        %v1119 = vpop.permute.xlu0 %1118
        %1120 = vrot.lane.b32.xlu0 %v1101, 24
        %v1121 = vpop.permute.xlu0 %1120
        %1122 = vrot.lane.b32.xlu0 %v1102, 24
        %v1123 = vpop.permute.xlu0 %1122
        %1124 = vrot.lane.b32.xlu0 %v1103, 24
        %v1125 = vpop.permute.xlu0 %1124
        %1126 = vrot.lane.b32.xlu0 %v1104, 24
        %v1127 = vpop.permute.xlu0 %1126
        %1128 = vrot.lane.b32.xlu0 %v1105, 24
        %v1129 = vpop.permute.xlu0 %1128
        %vm1138 = vcmask 224448
        %1139 = vst.msk [vmem:[#allocation3] sm:$0xf] %vm1138, %v1115
        %1140 = vst.msk [vmem:[#allocation3 + $0x4] sm:$0xf] %vm1138, %v1117
        %1141 = vst.msk [vmem:[#allocation3 + $0x8] sm:$0xf] %vm1138, %v1119
        %1142 = vst.msk [vmem:[#allocation3 + $0xc] sm:$0xf] %vm1138, %v1121
        %1143 = vst.msk [vmem:[#allocation3 + $0x10] sm:$0xf] %vm1138, %v1123
        %1144 = vst.msk [vmem:[#allocation3 + $0x14] sm:$0xf] %vm1138, %v1125
        %1145 = vst.msk [vmem:[#allocation3 + $0x18] sm:$0xf] %vm1138, %v1127
        %1146 = vst.msk [vmem:[#allocation3 + $0x1c] sm:$0xf] %vm1138, %v1129
        %v1147 = vld [vmem:[%s1097] sm:$0xf]
        %v1148 = vld [vmem:[%s1097 + $0x4] sm:$0x1]
        %v1149 = vld [vmem:[%s1097 + $0x8] sm:$0xf]
        %v1150 = vld [vmem:[%s1097 + $0xc] sm:$0x1]
        %v1151 = vld [vmem:[%s1097 + $0x10] sm:$0xf]
        %v1152 = vld [vmem:[%s1097 + $0x14] sm:$0x1]
        %v1153 = vld [vmem:[%s1097 + $0x18] sm:$0xf]
        %v1154 = vld [vmem:[%s1097 + $0x1c] sm:$0x1]
        %v1155 = vld [vmem:[%s1097 + $0x20] sm:$0xf]
        %v1156 = vld [vmem:[%s1097 + $0x24] sm:$0x1]
        %v1157 = vld [vmem:[%s1097 + $0x28] sm:$0xf]
        %v1158 = vld [vmem:[%s1097 + $0x2c] sm:$0x1]
        %v1159 = vld [vmem:[%s1097 + $0x30] sm:$0xf]
        %v1160 = vld [vmem:[%s1097 + $0x34] sm:$0x1]
        %v1161 = vld [vmem:[%s1097 + $0x38] sm:$0xf]
        %v1162 = vld [vmem:[%s1097 + $0x3c] sm:$0x1]
        %v1164 = vshrl.u32 %v1147, 16
        %v1166 = vrot.slane %v1164, 4
        %v1167 = vshll.u32 %v1147, 16
        %v1169 = vrot.slane %v1167, 5
        %v1170 = vor.u32 %v1166, %v1169
        %v1171 = vrot.slane %v1170, 4
        %v1173 = vshll.u32 %v1148, 16
        %v1175 = vrot.slane %v1173, 5
        %v1176 = vsel %vm544, %v1171, %v1175
        %v1178 = vshrl.u32 %v1149, 16
        %v1180 = vrot.slane %v1178, 4
        %v1181 = vshll.u32 %v1149, 16
        %v1183 = vrot.slane %v1181, 5
        %v1184 = vor.u32 %v1180, %v1183
        %v1185 = vrot.slane %v1184, 4
        %v1187 = vshll.u32 %v1150, 16
        %v1189 = vrot.slane %v1187, 5
        %v1190 = vsel %vm544, %v1185, %v1189
        %v1192 = vshrl.u32 %v1151, 16
        %v1194 = vrot.slane %v1192, 4
        %v1195 = vshll.u32 %v1151, 16
        %v1197 = vrot.slane %v1195, 5
        %v1198 = vor.u32 %v1194, %v1197
        %v1199 = vrot.slane %v1198, 4
        %v1201 = vshll.u32 %v1152, 16
        %v1203 = vrot.slane %v1201, 5
        %v1204 = vsel %vm544, %v1199, %v1203
        %v1206 = vshrl.u32 %v1153, 16
        %v1208 = vrot.slane %v1206, 4
        %v1209 = vshll.u32 %v1153, 16
        %v1211 = vrot.slane %v1209, 5
        %v1212 = vor.u32 %v1208, %v1211
        %v1213 = vrot.slane %v1212, 4
        %v1215 = vshll.u32 %v1154, 16
        %v1217 = vrot.slane %v1215, 5
        %v1218 = vsel %vm544, %v1213, %v1217
        %v1220 = vshrl.u32 %v1155, 16
        %v1222 = vrot.slane %v1220, 4
        %v1223 = vshll.u32 %v1155, 16
        %v1225 = vrot.slane %v1223, 5
        %v1226 = vor.u32 %v1222, %v1225
        %v1227 = vrot.slane %v1226, 4
        %v1229 = vshll.u32 %v1156, 16
        %v1231 = vrot.slane %v1229, 5
        %v1232 = vsel %vm544, %v1227, %v1231
        %v1234 = vshrl.u32 %v1157, 16
        %v1236 = vrot.slane %v1234, 4
        %v1237 = vshll.u32 %v1157, 16
        %v1239 = vrot.slane %v1237, 5
        %v1240 = vor.u32 %v1236, %v1239
        %v1241 = vrot.slane %v1240, 4
        %v1243 = vshll.u32 %v1158, 16
        %v1245 = vrot.slane %v1243, 5
        %v1246 = vsel %vm544, %v1241, %v1245
        %v1248 = vshrl.u32 %v1159, 16
        %v1250 = vrot.slane %v1248, 4
        %v1251 = vshll.u32 %v1159, 16
        %v1253 = vrot.slane %v1251, 5
        %v1254 = vor.u32 %v1250, %v1253
        %v1255 = vrot.slane %v1254, 4
        %v1257 = vshll.u32 %v1160, 16
        %v1259 = vrot.slane %v1257, 5
        %v1260 = vsel %vm544, %v1255, %v1259
        %v1262 = vshrl.u32 %v1161, 16
        %v1264 = vrot.slane %v1262, 4
        %v1265 = vshll.u32 %v1161, 16
        %v1267 = vrot.slane %v1265, 5
        %v1268 = vor.u32 %v1264, %v1267
        %v1269 = vrot.slane %v1268, 4
        %v1271 = vshll.u32 %v1162, 16
        %v1273 = vrot.slane %v1271, 5
        %v1274 = vsel %vm544, %v1269, %v1273
        %1275 = vrot.lane.b32.xlu0 %v1176, 28
        %v1276 = vpop.permute.xlu0 %1275
        %1277 = vrot.lane.b32.xlu0 %v1190, 28
        %v1278 = vpop.permute.xlu0 %1277
        %1279 = vrot.lane.b32.xlu0 %v1204, 28
        %v1280 = vpop.permute.xlu0 %1279
        %1281 = vrot.lane.b32.xlu0 %v1218, 28
        %v1282 = vpop.permute.xlu0 %1281
        %1283 = vrot.lane.b32.xlu0 %v1232, 28
        %v1284 = vpop.permute.xlu0 %1283
        %1285 = vrot.lane.b32.xlu0 %v1246, 28
        %v1286 = vpop.permute.xlu0 %1285
        %1287 = vrot.lane.b32.xlu0 %v1260, 28
        %v1288 = vpop.permute.xlu0 %1287
        %1289 = vrot.lane.b32.xlu0 %v1274, 28
        %v1290 = vpop.permute.xlu0 %1289
        %vm1299 = vcmask 257248
        %1300 = vst.msk [vmem:[#allocation3] sm:$0xf] %vm1299, %v1276
        %1301 = vst.msk [vmem:[#allocation3 + $0x4] sm:$0xf] %vm1299, %v1278
        %1302 = vst.msk [vmem:[#allocation3 + $0x8] sm:$0xf] %vm1299, %v1280
        %1303 = vst.msk [vmem:[#allocation3 + $0xc] sm:$0xf] %vm1299, %v1282
        %1304 = vst.msk [vmem:[#allocation3 + $0x10] sm:$0xf] %vm1299, %v1284
        %1305 = vst.msk [vmem:[#allocation3 + $0x14] sm:$0xf] %vm1299, %v1286
        %1306 = vst.msk [vmem:[#allocation3 + $0x18] sm:$0xf] %vm1299, %v1288
        %1307 = vst.msk [vmem:[#allocation3 + $0x1c] sm:$0xf] %vm1299, %v1290
        %v1308 = vld [vmem:[%s1097] sm:$0xe]
        %v1309 = vld [vmem:[%s1097 + $0x4] sm:$0x1]
        %v1310 = vld [vmem:[%s1097 + $0x8] sm:$0xe]
        %v1311 = vld [vmem:[%s1097 + $0xc] sm:$0x1]
        %v1312 = vld [vmem:[%s1097 + $0x10] sm:$0xe]
        %v1313 = vld [vmem:[%s1097 + $0x14] sm:$0x1]
        %v1314 = vld [vmem:[%s1097 + $0x18] sm:$0xe]
        %v1315 = vld [vmem:[%s1097 + $0x1c] sm:$0x1]
        %v1316 = vld [vmem:[%s1097 + $0x20] sm:$0xe]
        %v1317 = vld [vmem:[%s1097 + $0x24] sm:$0x1]
        %v1318 = vld [vmem:[%s1097 + $0x28] sm:$0xe]
        %v1319 = vld [vmem:[%s1097 + $0x2c] sm:$0x1]
        %v1320 = vld [vmem:[%s1097 + $0x30] sm:$0xe]
        %v1321 = vld [vmem:[%s1097 + $0x34] sm:$0x1]
        %v1322 = vld [vmem:[%s1097 + $0x38] sm:$0xe]
        %v1323 = vld [vmem:[%s1097 + $0x3c] sm:$0x1]
        %v1340 = vrot.slane %v1308, 5
        %v1341 = vrot.slane %v1340, 4
        %v1342 = vrot.slane %v1309, 5
        %v1343 = vsel %vm724, %v1341, %v1342
        %v1344 = vrot.slane %v1310, 5
        %v1345 = vrot.slane %v1344, 4
        %v1346 = vrot.slane %v1311, 5
        %v1347 = vsel %vm724, %v1345, %v1346
        %v1348 = vrot.slane %v1312, 5
        %v1349 = vrot.slane %v1348, 4
        %v1350 = vrot.slane %v1313, 5
        %v1351 = vsel %vm724, %v1349, %v1350
        %v1352 = vrot.slane %v1314, 5
        %v1353 = vrot.slane %v1352, 4
        %v1354 = vrot.slane %v1315, 5
        %v1355 = vsel %vm724, %v1353, %v1354
        %v1356 = vrot.slane %v1316, 5
        %v1357 = vrot.slane %v1356, 4
        %v1358 = vrot.slane %v1317, 5
        %v1359 = vsel %vm724, %v1357, %v1358
        %v1360 = vrot.slane %v1318, 5
        %v1361 = vrot.slane %v1360, 4
        %v1362 = vrot.slane %v1319, 5
        %v1363 = vsel %vm724, %v1361, %v1362
        %v1364 = vrot.slane %v1320, 5
        %v1365 = vrot.slane %v1364, 4
        %v1366 = vrot.slane %v1321, 5
        %v1367 = vsel %vm724, %v1365, %v1366
        %v1368 = vrot.slane %v1322, 5
        %v1369 = vrot.slane %v1368, 4
        %v1370 = vrot.slane %v1323, 5
        %v1371 = vsel %vm724, %v1369, %v1370
        %1372 = vrot.lane.b32.xlu0 %v1343, 32
        %v1373 = vpop.permute.xlu0 %1372
        %1374 = vrot.lane.b32.xlu0 %v1347, 32
        %v1375 = vpop.permute.xlu0 %1374
        %1376 = vrot.lane.b32.xlu0 %v1351, 32
        %v1377 = vpop.permute.xlu0 %1376
        %1378 = vrot.lane.b32.xlu0 %v1355, 32
        %v1379 = vpop.permute.xlu0 %1378
        %1380 = vrot.lane.b32.xlu0 %v1359, 32
        %v1381 = vpop.permute.xlu0 %1380
        %1382 = vrot.lane.b32.xlu0 %v1363, 32
        %v1383 = vpop.permute.xlu0 %1382
        %1384 = vrot.lane.b32.xlu0 %v1367, 32
        %v1385 = vpop.permute.xlu0 %1384
        %1386 = vrot.lane.b32.xlu0 %v1371, 32
        %v1387 = vpop.permute.xlu0 %1386
        %vm1396 = vcmask 290048
        %1397 = vst.msk [vmem:[#allocation3] sm:$0xf] %vm1396, %v1373
        %1398 = vst.msk [vmem:[#allocation3 + $0x4] sm:$0xf] %vm1396, %v1375
        %1399 = vst.msk [vmem:[#allocation3 + $0x8] sm:$0xf] %vm1396, %v1377
        %1400 = vst.msk [vmem:[#allocation3 + $0xc] sm:$0xf] %vm1396, %v1379
        %1401 = vst.msk [vmem:[#allocation3 + $0x10] sm:$0xf] %vm1396, %v1381
        %1402 = vst.msk [vmem:[#allocation3 + $0x14] sm:$0xf] %vm1396, %v1383
        %1403 = vst.msk [vmem:[#allocation3 + $0x18] sm:$0xf] %vm1396, %v1385
        %1404 = vst.msk [vmem:[#allocation3 + $0x1c] sm:$0xf] %vm1396, %v1387
        %v1405 = vld [vmem:[#allocation3] sm:$0xf]
        %v1406 = vld [vmem:[#allocation3 + $0x4] sm:$0xf]
        %v1407 = vld [vmem:[#allocation3 + $0x8] sm:$0xf]
        %v1408 = vld [vmem:[#allocation3 + $0xc] sm:$0xf]
        %v1409 = vld [vmem:[#allocation3 + $0x10] sm:$0xf]
        %v1410 = vld [vmem:[#allocation3 + $0x14] sm:$0xf]
        %v1411 = vld [vmem:[#allocation3 + $0x18] sm:$0xf]
        %v1412 = vld [vmem:[#allocation3 + $0x1c] sm:$0xf]
        %v1413 = vld [vmem:[%s1] sm:$0xf]
        %v1414 = vld [vmem:[%s1 + $0x4] sm:$0xf]
        %v1415 = vld [vmem:[%s1 + $0x8] sm:$0xf]
        %v1416 = vld [vmem:[%s1 + $0xc] sm:$0xf]
        %v1417 = vld [vmem:[%s1 + $0x10] sm:$0x3]
        %v1426 = vunpack.c.l.b16 %v1405
        %v1427 = vunpack.c.l.b16 %v1406
        %v1428 = vunpack.c.l.b16 %v1407
        %v1429 = vunpack.c.l.b16 %v1408
        %v1430 = vunpack.c.l.b16 %v1409
        %v1431 = vunpack.c.l.b16 %v1410
        %v1432 = vunpack.c.l.b16 %v1411
        %v1433 = vunpack.c.l.b16 %v1412
        %v1434 = vpack.c.b16 %v1427, %v1426
        %v1435 = vpack.c.b16 %v1429, %v1428
        %v1436 = vpack.c.b16 %v1431, %v1430
        %v1437 = vpack.c.b16 %v1433, %v1432
        %v1443 = vunpack.c.l.b16 %v1413
        %v1444 = vunpack.c.l.b16 %v1414
        %v1445 = vunpack.c.l.b16 %v1415
        %v1446 = vunpack.c.l.b16 %v1416
        %v1447 = vunpack.c.l.b16 %v1417
        %v1448 = vpack.c.b16 %v1444, %v1443
        %v1449 = vpack.c.b16 %v1446, %v1445
        %v1450 = vpack.c.b16 %v1447, %v1447
        %vm1453 = vcmask 293888
        %v1455 = vsel %vm1453, %v1434, 0
        %v1458 = vsel %vm1453, %v1435, 0
        %v1461 = vsel %vm1453, %v1436, 0
        %v1464 = vsel %vm1453, %v1437, 0
        %vm1466 = vcmask 1041408
        %v1468 = vsel %vm1466, %v1450, 0
        %1470 = vmatprep.subr.bf16.mxu0 0
        %1471 = vmatpush1.bf16.msra.mxu0 0
        %1472 = vmatprep.subr.bf16.mxu0 0
        %1473 = vmatpush1.bf16.msra.mxu0 0
        %1474 = vmatprep.subr.bf16.mxu0 0
        %1475 = vmatpush1.bf16.msra.mxu0 0
        %1476 = vmatprep.subr.bf16.mxu0 0
        %1477 = vmatpush1.bf16.msra.mxu0 0
        %1478 = vmatprep.subr.bf16.mxu0 0
        %1479 = vmatpush1.bf16.msra.mxu0 0
        %1480 = vmatprep.subr.bf16.mxu0 0
        %1481 = vmatpush1.bf16.msra.mxu0 %v1468
        %1482 = vmatprep.subr.bf16.mxu0 0
        %1483 = vmatpush1.bf16.msra.mxu0 %v1449
        %1484 = vmatprep.subr.bf16.mxu0 0
        %1485 = vmatpush1.bf16.msra.mxu0 %v1448
        %1486 = vmatprep.subr.bf16.mxu0 0
        %1487 = vmatpush2.bf16.msra.mxu0 0
        %1488 = vmatprep.subr.bf16.mxu0 0
        %1489 = vmatpush2.bf16.msra.mxu0 0
        %1490 = vmatprep.subr.bf16.mxu0 0
        %1491 = vmatpush2.bf16.msra.mxu0 0
        %1492 = vmatprep.subr.bf16.mxu0 0
        %1493 = vmatpush2.bf16.msra.mxu0 0
        %1494 = vmatprep.subr.bf16.mxu0 0
        %1495 = vmatpush2.bf16.msra.mxu0 0
        %1496 = vmatprep.subr.bf16.mxu0 0
        %1497 = vmatpush2.bf16.msra.mxu0 0
        %1498 = vmatprep.subr.bf16.mxu0 0
        %1499 = vmatpush2.bf16.msra.mxu0 0
        %1500 = vmatprep.subr.bf16.mxu0 0
        %1501 = vmatpush2.bf16.msra.mxu0 0
        %1502 = vmatprep.mubr.bf16.mxu0 0
        %1503 = vmatmul.mubr.bf16.gmra.mxu0 %v1455
        %v1504 = vpop.f32.mrf.mxu0
        %v1505 = vadd.f32 0.0, %v1504
        %v1506 = vpop.f32.mrf.mxu0
        %v1507 = vpop.f32.mrf.mxu0
        %v1508 = vadd.f32 0.0, %v1507
        %v1509 = vpop.f32.mrf.mxu0
        %1510 = vmatprep.mubr.bf16.mxu0 0
        %1511 = vmatmul.mubr.bf16.gmra.mxu0 %v1458
        %v1512 = vpop.f32.mrf.mxu0
        %v1513 = vadd.f32 0.0, %v1512
        %v1514 = vpop.f32.mrf.mxu0
        %v1515 = vpop.f32.mrf.mxu0
        %v1516 = vadd.f32 0.0, %v1515
        %v1517 = vpop.f32.mrf.mxu0
        %1518 = vmatprep.mubr.bf16.mxu0 0
        %1519 = vmatmul.mubr.bf16.gmra.mxu0 %v1461
        %v1520 = vpop.f32.mrf.mxu0
        %v1521 = vadd.f32 0.0, %v1520
        %v1522 = vpop.f32.mrf.mxu0
        %v1523 = vpop.f32.mrf.mxu0
        %v1524 = vadd.f32 0.0, %v1523
        %v1525 = vpop.f32.mrf.mxu0
        %1526 = vmatprep.mubr.bf16.mxu0 0
        %1527 = vmatmul.mubr.bf16.gmra.mxu0 %v1464
        %v1528 = vpop.f32.mrf.mxu0
        %v1529 = vadd.f32 0.0, %v1528
        %v1530 = vpop.f32.mrf.mxu0
        %v1531 = vpop.f32.mrf.mxu0
        %v1532 = vadd.f32 0.0, %v1531
        %v1533 = vpop.f32.mrf.mxu0
        %1534 = vdwg.mxu0
        %v1535 = vpack.c.bf16 %v1508, %v1505
        %v1536 = vpack.c.bf16 %v1516, %v1513
        %v1537 = vpack.c.bf16 %v1524, %v1521
        %v1538 = vpack.c.bf16 %v1532, %v1529
        %v1543 = vunpack.c.l.b16 %v1535
        %v1544 = vunpack.c.h.b16 %v1535
        %v1545 = vunpack.c.l.b16 %v1536
        %v1546 = vunpack.c.h.b16 %v1536
        %v1547 = vunpack.c.l.b16 %v1537
        %v1548 = vunpack.c.h.b16 %v1537
        %v1549 = vunpack.c.l.b16 %v1538
        %v1550 = vunpack.c.h.b16 %v1538
        %v1551 = vpack.c.b16 %v1543, %v1543
        %v1552 = vpack.c.b16 %v1544, %v1544
        %v1553 = vpack.c.b16 %v1545, %v1545
        %v1554 = vpack.c.b16 %v1546, %v1546
        %v1555 = vpack.c.b16 %v1547, %v1547
        %v1556 = vpack.c.b16 %v1548, %v1548
        %v1557 = vpack.c.b16 %v1549, %v1549
        %v1558 = vpack.c.b16 %v1550, %v1550
        %vm1567 = vcmask 60416
        %1568 = vst.msk [vmem:[%s201] sm:$0xf] %vm1567, %v1551
        %1569 = vst.msk [vmem:[%s201 + $0x4] sm:$0xf] %vm1567, %v1552
        %1570 = vst.msk [vmem:[%s201 + $0x8] sm:$0xf] %vm1567, %v1553
        %1571 = vst.msk [vmem:[%s201 + $0xc] sm:$0xf] %vm1567, %v1554
        %1572 = vst.msk [vmem:[%s201 + $0x10] sm:$0xf] %vm1567, %v1555
        %1573 = vst.msk [vmem:[%s201 + $0x14] sm:$0xf] %vm1567, %v1556
        %1574 = vst.msk [vmem:[%s201 + $0x18] sm:$0xf] %vm1567, %v1557
        %1575 = vst.msk [vmem:[%s201 + $0x1c] sm:$0xf] %vm1567, %v1558
        %vm1576 = vcmask 64512
        %v1577 = vsel %vm1576, %v1505, 0.0
        %v1578 = vsel %vm1576, %v1508, 0.0
        %v1579 = vadd.f32 %v1577, %v1578
        %v1580 = vsel %vm1576, %v1513, 0.0
        %v1581 = vadd.f32 %v1579, %v1580
        %v1582 = vsel %vm1576, %v1516, 0.0
        %v1583 = vadd.f32 %v1581, %v1582
        %v1584 = vsel %vm1576, %v1521, 0.0
        %v1585 = vadd.f32 %v1583, %v1584
        %v1586 = vsel %vm1576, %v1524, 0.0
        %v1587 = vadd.f32 %v1585, %v1586
        %v1588 = vsel %vm1576, %v1529, 0.0
        %v1589 = vadd.f32 %v1587, %v1588
        %v1590 = vsel %vm1576, %v1532, 0.0
        %v1591 = vadd.f32 %v1589, %v1590
        %v1592 = vrot.slane %v1591, 4
        %v1593 = vadd.f32 %v1591, %v1592
        %v1594 = vrot.slane %v1593, 2
        %v1595 = vadd.f32 %v1593, %v1594
        %v1596 = vrot.slane %v1595, 1
        %v1597 = vadd.f32 %v1595, %v1596
        %vm1598 = vcmask 57344
        %1599 = vst.msk [vmem:[%s196] sm:$0x1] %vm1598, %v1597
        %v1600 = vmul.f32 %v1505, %v1505
        %v1601 = vmul.f32 %v1508, %v1508
        %v1602 = vmul.f32 %v1513, %v1513
        %v1603 = vmul.f32 %v1516, %v1516
        %v1604 = vmul.f32 %v1521, %v1521
        %v1605 = vmul.f32 %v1524, %v1524
        %v1606 = vmul.f32 %v1529, %v1529
        %v1607 = vmul.f32 %v1532, %v1532
        %v1608 = vsel %vm1576, %v1600, 0.0
        %v1609 = vsel %vm1576, %v1601, 0.0
        %v1610 = vadd.f32 %v1608, %v1609
        %v1611 = vsel %vm1576, %v1602, 0.0
        %v1612 = vadd.f32 %v1610, %v1611
        %v1613 = vsel %vm1576, %v1603, 0.0
        %v1614 = vadd.f32 %v1612, %v1613
        %v1615 = vsel %vm1576, %v1604, 0.0
        %v1616 = vadd.f32 %v1614, %v1615
        %v1617 = vsel %vm1576, %v1605, 0.0
        %v1618 = vadd.f32 %v1616, %v1617
        %v1619 = vsel %vm1576, %v1606, 0.0
        %v1620 = vadd.f32 %v1618, %v1619
        %v1621 = vsel %vm1576, %v1607, 0.0
        %v1622 = vadd.f32 %v1620, %v1621
        %v1623 = vrot.slane %v1622, 4
        %v1624 = vadd.f32 %v1622, %v1623
        %v1625 = vrot.slane %v1624, 2
        %v1626 = vadd.f32 %v1624, %v1625
        %v1627 = vrot.slane %v1626, 1
        %v1628 = vadd.f32 %v1626, %v1627
        %1629 = vst.msk [vmem:[%s196 + $0x1] sm:$0x1] %vm1598, %v1628
        %p1630 = scmp.lt.s32.totalorder %s21, 1
        %s1631 = scalar_select %p1630, %s21, 1
        %s1632 = smul.addr %s1631, 8
        %s1633 = smul.addr %s1632, 4
        %s1634 = scalar_lea.vmem %s2, %s1633
        %s1635 = sand.u32 %s102, 1
        %s1636 = scalar_lea.sflag [#allocation6], %s1635
        %s1637 = sand.u32 %s102, 1
        %s1638 = smul.addr %s1637, 2
        %s1639 = scalar_lea.vmem [#allocation7], %s1638
        // Predicated region
        $region33: #{tpu_custom_call.1} parent=27 // pred_check
          %p1640 = pneg %p86
        $region34: #{tpu_custom_call.1} parent=27 // pred_check_branch
          %1642 = sbr.rel (%p1640) target = $region36
        $region35: #{tpu_custom_call.1} parent=27 // pred_region
          _
        $region36: #{tpu_custom_call.1} parent=27 // pred_fallthru
          _
        // Predicated region
        $region37: #{tpu_custom_call.1} parent=27 // pred_check
          %p1643 = pneg %p112
        $region38: #{tpu_custom_call.1} parent=27 // pred_check_branch
          %1645 = sbr.rel (%p1643) target = $region40
        $region39: #{tpu_custom_call.1} parent=27 // pred_region
          %s1647 = ssub.s32 32, 32
          %1648 = vsyncadd %s1636, %s1647
          %s1649 = smul.addr %s21, 32
          %s1650 = scalar_lea.hbm %s3, %s1649
          %s1652 = sshll.u32 %s1639, 4
          %s1653 = int_to_ptr.vmem [resolvable:$true] %s1652
          %1655 = dma.vmem_to_hbm [thread:$0]  %s1653, 32, %s1650, %s1636
        $region40: #{tpu_custom_call.1} parent=27 // pred_fallthru
          _
      $region28: #{tpu_custom_call.1} parent=5 // pred_fallthru
        _
      %p1656 = scmp.le.s32.totalorder 2, %s16
      // Predicated region
      $region41: #{tpu_custom_call.1} parent=5 // pred_check
        %p1657 = pneg %p1656
      $region42: #{tpu_custom_call.1} parent=5 // pred_check_branch
        %1659 = sbr.rel (%p1657) target = $region44
      $region43: #{tpu_custom_call.1} parent=5 // pred_region
        %s1660 = ssub.s32 %s16, 2
        // Predicated region
        $region45: #{tpu_custom_call.1} parent=43 // pred_check
          %p1661 = pneg %p92
        $region46: #{tpu_custom_call.1} parent=43 // pred_check_branch
          %1663 = sbr.rel (%p1661) target = $region48
        $region47: #{tpu_custom_call.1} parent=43 // pred_region
          %p1664 = scmp.lt.s32.totalorder %s22, 1
          %s1665 = scalar_select %p1664, %s22, 1
          %s1666 = smul.addr %s1665, 8
          %s1667 = smul.addr %s1666, 4
          %s1668 = scalar_lea.vmem %s2, %s1667
        $region48: #{tpu_custom_call.1} parent=43 // pred_fallthru
          _
        // Predicated region
        $region49: #{tpu_custom_call.1} parent=43 // pred_check
          %p1669 = pneg %p118
        $region50: #{tpu_custom_call.1} parent=43 // pred_check_branch
          %1671 = sbr.rel (%p1669) target = $region52
        $region51: #{tpu_custom_call.1} parent=43 // pred_region
          %s1672 = sand.u32 %s103, 1
          %s1673 = scalar_lea.sflag [#allocation6], %s1672
          %s1674 = sand.u32 %s103, 1
          %s1675 = smul.addr %s1674, 2
          %s1676 = scalar_lea.vmem [#allocation7], %s1675
          %1677 = dma.done %s1673, 32
        $region52: #{tpu_custom_call.1} parent=43 // pred_fallthru
          _
      $region44: #{tpu_custom_call.1} parent=5 // pred_fallthru
        _
    $region6: #{tpu_custom_call.1} parent=1 // loop_footer
      %s20 = sadd.s32 1, %s16
    $region7: #{tpu_custom_call.1} parent=1 // loop_footer_branch
      %15 = sbr.rel target = $region3
    $region8: #{tpu_custom_call.1} parent=1 // loop_exit
      _
    %1678 = vsyncpa [#allocation5], 1
    %s1679 = scalar_lea.sflag [#allocation5], 1
    %1680 = vsyncpa %s1679, 1
    %1681 = vsyncpa [#allocation6], 1
    %s1682 = scalar_lea.sflag [#allocation6], 1
    %1683 = vsyncpa %s1682, 1

</llo_original>
